<compile_context>
chip_gen: v6e
topology: v6e:2x2x1
jax: 0.10.0
libtpu: 0.0.40
codegen_flags: <defaults>
</compile_context>

<pallas_src>
import functools

import jax
import jax.numpy as jnp
from jax.experimental import pallas as pl
from jax.experimental.pallas import tpu as pltpu

EPS = 1e-5                      # nn.BatchNorm1d default eps
LANE = 128                      # TPU lane width (last-dim multiple)
SUBLANE = 8                     # TPU sublane width (second-to-last multiple)
VMEM_LIMIT = 64 * 1024 * 1024   # generous but < physical VMEM on v5e/v6e/v7x


def _round_up(n, m):
    return ((n + m - 1) // m) * m


def _pad2d(a, rows, cols, value=0.0):
    r, c = a.shape
    return jnp.pad(a, ((0, rows - r), (0, cols - c)), constant_values=value)


# --------------------------------------------------------------------------
# Kernel 1: per-feature batch statistics of x (for BatchNorm1d #1).
# Grid: batch tiles (reduction axis). Outputs are resident accumulators that
# are converted to (mean, rstd) at the last grid step.
# --------------------------------------------------------------------------
def colstats_kernel(x_ref, mean_ref, rstd_ref, *, n_valid):
    i = pl.program_id(0)

    @pl.when(i == 0)
    def _():
        mean_ref[...] = jnp.zeros_like(mean_ref)
        rstd_ref[...] = jnp.zeros_like(rstd_ref)

    xt = x_ref[...]                                     # (TB, Dp) f32
    mean_ref[...] += jnp.sum(xt, axis=0, keepdims=True)        # running sum
    rstd_ref[...] += jnp.sum(xt * xt, axis=0, keepdims=True)   # running sumsq

    @pl.when(i == pl.num_programs(0) - 1)
    def _():
        inv_n = 1.0 / n_valid
        m = mean_ref[...] * inv_n
        v = rstd_ref[...] * inv_n - m * m               # biased variance
        mean_ref[...] = m
        rstd_ref[...] = jax.lax.rsqrt(v + EPS)


# --------------------------------------------------------------------------
# Kernel 2: BN1 -> ReLU -> Linear1 (bf16 MXU, f32 accum), fused with the
# accumulation of BN2 batch statistics over the produced activations.
# Padded batch rows are masked out of the statistics.
# --------------------------------------------------------------------------
def block1_kernel(x_ref, mean_ref, rstd_ref, g_ref, b_ref, w_ref,
                  h_ref, hsum_ref, hsq_ref, *, n_valid):
    i = pl.program_id(0)

    @pl.when(i == 0)
    def _():
        hsum_ref[...] = jnp.zeros_like(hsum_ref)
        hsq_ref[...] = jnp.zeros_like(hsq_ref)

    x = x_ref[...]                                      # (TB, Dp) f32
    xn = (x - mean_ref[...]) * rstd_ref[...] * g_ref[...] + b_ref[...]
    xn = jnp.maximum(xn, 0.0)                           # ReLU, f32

    h = jnp.dot(xn.astype(jnp.bfloat16), w_ref[...],    # w already bf16
                preferred_element_type=jnp.float32)     # (TB, Nbp) f32
    h_ref[...] = h

    # Mask rows beyond the true batch (zero-padded rows) out of the BN2 stats.
    tb = x.shape[0]
    row = i * tb + jax.lax.broadcasted_iota(jnp.int32, (tb, 1), 0)
    hm = jnp.where(row < n_valid, h, 0.0)
    hsum_ref[...] += jnp.sum(hm, axis=0, keepdims=True)
    hsq_ref[...] += jnp.sum(hm * hm, axis=0, keepdims=True)

    @pl.when(i == pl.num_programs(0) - 1)
    def _():
        inv_n = 1.0 / n_valid
        m = hsum_ref[...] * inv_n
        v = hsq_ref[...] * inv_n - m * m
        hsum_ref[...] = m                               # becomes mean2
        hsq_ref[...] = jax.lax.rsqrt(v + EPS)           # becomes rstd2


# --------------------------------------------------------------------------
# Kernel 3: BN2 (the first returned tensor) + classifier matmul.
# Purely parallel over batch tiles.
# --------------------------------------------------------------------------
def block2_kernel(h_ref, mean_ref, rstd_ref, g_ref, b_ref, w_ref,
                  feat_ref, logits_ref):
    h = h_ref[...]                                      # (TB, Nbp) f32
    y = (h - mean_ref[...]) * rstd_ref[...] * g_ref[...] + b_ref[...]
    feat_ref[...] = y
    logits_ref[...] = jnp.dot(y.astype(jnp.bfloat16), w_ref[...],  # w bf16
                              preferred_element_type=jnp.float32)


# --------------------------------------------------------------------------
# Wrapper
# --------------------------------------------------------------------------
@functools.partial(jax.jit, static_argnames=("batch_tile",))
def class_block_forward(x, params, *, batch_tile=128):
    """Forward of ClassBlock. Returns (bn2_features, logits)."""
    B, D = x.shape
    w1 = params["w1"]
    w2 = params["w2"]
    Nb = w1.shape[1]
    C = w2.shape[1]
    assert w1.shape[0] == D and w2.shape[0] == Nb, "parameter shape mismatch"

    g1 = params["g1"].reshape(1, D).astype(jnp.float32)
    b1 = params["b1"].reshape(1, D).astype(jnp.float32)
    g2 = params["g2"].reshape(1, Nb).astype(jnp.float32)
    b2 = params["b2"].reshape(1, Nb).astype(jnp.float32)

    # --- lane-dense padding: features -> multiples of 128, batch -> tile ---
    Dp = _round_up(D, LANE)
    Nbp = _round_up(Nb, LANE)
    Cp = _round_up(C, LANE)
    TB = min(batch_tile, _round_up(B, SUBLANE))
    Bp = _round_up(B, TB)
    nbt = Bp // TB

    xp = jnp.pad(x.astype(jnp.float32), ((0, Bp - B), (0, Dp - D)))
    g1p = _pad2d(g1, 1, Dp, 1.0)
    b1p = _pad2d(b1, 1, Dp, 0.0)
    g2p = _pad2d(g2, 1, Nbp, 1.0)
    b2p = _pad2d(b2, 1, Nbp, 0.0)
    # Matmul operands in bf16 (f32 accumulation happens inside the kernels).
    w1p = _pad2d(w1.astype(jnp.float32), Dp, Nbp).astype(jnp.bfloat16)
    w2p = _pad2d(w2.astype(jnp.float32), Nbp, Cp).astype(jnp.bfloat16)

    cparams_red = pltpu.CompilerParams(
        dimension_semantics=("arbitrary",), vmem_limit_bytes=VMEM_LIMIT)
    cparams_par = pltpu.CompilerParams(
        dimension_semantics=("parallel",), vmem_limit_bytes=VMEM_LIMIT)

    row_spec_D = pl.BlockSpec((1, Dp), lambda i: (0, 0))
    row_spec_Nb = pl.BlockSpec((1, Nbp), lambda i: (0, 0))

    # ---- pass 1: BN1 batch statistics (two-phase reduction over tiles) ----
    mean1, rstd1 = pl.pallas_call(
        functools.partial(colstats_kernel, n_valid=B),
        out_shape=(jax.ShapeDtypeStruct((1, Dp), jnp.float32),
                   jax.ShapeDtypeStruct((1, Dp), jnp.float32)),
        grid=(nbt,),
        in_specs=[pl.BlockSpec((TB, Dp), lambda i: (i, 0))],
        out_specs=(row_spec_D, row_spec_D),
        compiler_params=cparams_red,
        cost_estimate=pl.CostEstimate(
            flops=4 * Bp * Dp, transcendentals=Dp,
            bytes_accessed=4 * Bp * Dp + 8 * Dp),
    )(xp)

    # ---- pass 2: BN1 + ReLU + Linear1, fused with BN2 stats accumulation ----
    h, mean2, rstd2 = pl.pallas_call(
        functools.partial(block1_kernel, n_valid=B),
        out_shape=(jax.ShapeDtypeStruct((Bp, Nbp), jnp.float32),
                   jax.ShapeDtypeStruct((1, Nbp), jnp.float32),
                   jax.ShapeDtypeStruct((1, Nbp), jnp.float32)),
        grid=(nbt,),
        in_specs=[pl.BlockSpec((TB, Dp), lambda i: (i, 0)),
                  row_spec_D, row_spec_D, row_spec_D, row_spec_D,
                  pl.BlockSpec((Dp, Nbp), lambda i: (0, 0))],
        out_specs=(pl.BlockSpec((TB, Nbp), lambda i: (i, 0)),
                   row_spec_Nb, row_spec_Nb),
        compiler_params=cparams_red,
        cost_estimate=pl.CostEstimate(
            flops=2 * Bp * Dp * Nbp, transcendentals=Nbp,
            bytes_accessed=4 * Bp * Dp + 2 * Dp * Nbp + 4 * Bp * Nbp),
    )(xp, mean1, rstd1, g1p, b1p, w1p)

    # ---- pass 3: BN2 + classifier matmul (parallel over batch tiles) ----
    feat_p, logits_p = pl.pallas_call(
        block2_kernel,
        out_shape=(jax.ShapeDtypeStruct((Bp, Nbp), jnp.float32),
                   jax.ShapeDtypeStruct((Bp, Cp), jnp.float32)),
        grid=(nbt,),
        in_specs=[pl.BlockSpec((TB, Nbp), lambda i: (i, 0)),
                  row_spec_Nb, row_spec_Nb, row_spec_Nb, row_spec_Nb,
                  pl.BlockSpec((Nbp, Cp), lambda i: (0, 0))],
        out_specs=(pl.BlockSpec((TB, Nbp), lambda i: (i, 0)),
                   pl.BlockSpec((TB, Cp), lambda i: (i, 0))),
        compiler_params=cparams_par,
        cost_estimate=pl.CostEstimate(
            flops=2 * Bp * Nbp * Cp, transcendentals=0,
            bytes_accessed=8 * Bp * Nbp + 2 * Nbp * Cp + 4 * Bp * Cp),
    )(h, mean2, rstd2, g2p, b2p, w2p)

    # strip batch / feature padding
    return feat_p[:B, :Nb], logits_p[:B, :C]


# --------------------------------------------------------------------------
# Pure-JAX reference (same semantics) for the correctness check.
# --------------------------------------------------------------------------
def reference(x, params):
    def bn(v, g, b):
        m = jnp.mean(v, axis=0, keepdims=True)
        var = jnp.mean((v - m) ** 2, axis=0, keepdims=True)   # biased
        return (v - m) * jax.lax.rsqrt(var + EPS) * g + b

    h = jnp.maximum(bn(x, params["g1"], params["b1"]), 0.0) @ params["w1"]
    y = bn(h, params["g2"], params["b2"])
    logits = y @ params["w2"]
    return y, logits


if __name__ == "__main__":
    # Small, deliberately non-128-aligned shapes to exercise the padding /
    # row-masking paths: batch=50, input_dim=300, num_bottleneck=256, classes=130.
    B, input_dim, num_bottleneck, class_num = 50, 300, 256, 130

    key = jax.random.PRNGKey(0)
    kx, k1, k2, k3, k4, k5, k6 = jax.random.split(key, 7)
    f32 = jnp.float32
    x = jax.random.normal(kx, (B, input_dim), f32)
    params = {
        # BatchNorm1d(input_dim): weight ~ N(1, 0.02) per weights_init_kaiming
        "g1": 1.0 + 0.02 * jax.random.normal(k1, (1, input_dim), f32),
        "b1": 0.05 * jax.random.normal(k2, (1, input_dim), f32),
        # Linear(input_dim, num_bottleneck, bias=False), kaiming fan_out
        "w1": jnp.sqrt(2.0 / num_bottleneck)
              * jax.random.normal(k3, (input_dim, num_bottleneck), f32),
        # BatchNorm1d(num_bottleneck)
        "g2": 1.0 + 0.02 * jax.random.normal(k4, (1, num_bottleneck), f32),
        "b2": 0.05 * jax.random.normal(k5, (1, num_bottleneck), f32),
        # classifier Linear(num_bottleneck, class_num, bias=False), std=0.001
        "w2": 0.001 * jax.random.normal(k6, (num_bottleneck, class_num), f32),
    }

    feat, logits = class_block_forward(x, params)
    feat, logits = jax.block_until_ready((feat, logits))

    ref_feat, ref_logits = reference(x, params)
    assert feat.shape == (B, num_bottleneck)
    assert logits.shape == (B, class_num)
    # bf16 MXU operands with f32 accumulation -> loose-ish tolerance
    assert jnp.allclose(feat, ref_feat, rtol=5e-2, atol=5e-2), \
        float(jnp.max(jnp.abs(feat - ref_feat)))
    assert jnp.allclose(logits, ref_logits, rtol=5e-2, atol=5e-2), \
        float(jnp.max(jnp.abs(logits - ref_logits)))

    print("KERNEL_OK")
</pallas_src>

<mosaic_0001>
module attributes {stable_mosaic.version = 11 : i64} {
  func.func @colstats_kernel(%arg0: i32, %arg1: memref<56x384xf32, #tpu.memory_space<vmem>>, %arg2: memref<1x384xf32, #tpu.memory_space<vmem>>, %arg3: memref<1x384xf32, #tpu.memory_space<vmem>>) attributes {dimension_semantics = [#tpu.dimension_semantics<arbitrary>], iteration_bounds = array<i64: 1>, scalar_prefetch = 0 : i64, scratch_operands = 0 : i64, tpu.core_type = #tpu.core_type<tc>, window_params = [{transform_indices = @transform_0, window_bounds = array<i64: 56, 384>}, {pipeline_mode = #tpu.pipeline_mode<synchronous>, transform_indices = @transform_1, window_bounds = array<i64: 1, 384>}, {pipeline_mode = #tpu.pipeline_mode<synchronous>, transform_indices = @transform_2, window_bounds = array<i64: 1, 384>}]} {
    %c0_i32 = arith.constant 0 : i32
    %0 = arith.cmpi eq, %arg0, %c0_i32 : i32
    %1 = arith.extui %0 : i1 to i32
    %c0_i32_0 = arith.constant 0 : i32
    %2 = arith.cmpi ne, %1, %c0_i32_0 : i32
    scf.if %2 {
      %cst_13 = arith.constant 0.000000e+00 : f32
      %18 = vector.broadcast %cst_13 : f32 to vector<1x384xf32>
      %c0_14 = arith.constant 0 : index
      %c0_15 = arith.constant 0 : index
      %19 = vector.load %arg2[%c0_14, %c0_15] : memref<1x384xf32, #tpu.memory_space<vmem>>, vector<1x384xf32>
      tpu.vector_store %arg2[%c0_14, %c0_15], %18 {strides = array<i32>} : memref<1x384xf32, #tpu.memory_space<vmem>>, vector<1x384xf32>,
      %cst_16 = arith.constant 0.000000e+00 : f32
      %20 = vector.broadcast %cst_16 : f32 to vector<1x384xf32>
      %c0_17 = arith.constant 0 : index
      %c0_18 = arith.constant 0 : index
      %21 = vector.load %arg3[%c0_17, %c0_18] : memref<1x384xf32, #tpu.memory_space<vmem>>, vector<1x384xf32>
      tpu.vector_store %arg3[%c0_17, %c0_18], %20 {strides = array<i32>} : memref<1x384xf32, #tpu.memory_space<vmem>>, vector<1x384xf32>,
    } else {
    }
    %c0 = arith.constant 0 : index
    %c0_1 = arith.constant 0 : index
    %3 = vector.load %arg1[%c0, %c0_1] : memref<56x384xf32, #tpu.memory_space<vmem>>, vector<56x384xf32>
    %c0_2 = arith.constant 0 : index
    %c0_3 = arith.constant 0 : index
    %4 = vector.load %arg2[%c0_2, %c0_3] : memref<1x384xf32, #tpu.memory_space<vmem>>, vector<1x384xf32>
    %cst = arith.constant dense<0.000000e+00> : vector<384xf32>
    %5 = vector.multi_reduction <add>, %3, %cst [0] : vector<56x384xf32> to vector<384xf32>
    %6 = vector.shape_cast %5 : vector<384xf32> to vector<1x384xf32>
    %7 = arith.addf %4, %6 : vector<1x384xf32>
    %c0_4 = arith.constant 0 : index
    %c0_5 = arith.constant 0 : index
    %8 = vector.load %arg2[%c0_4, %c0_5] : memref<1x384xf32, #tpu.memory_space<vmem>>, vector<1x384xf32>
    tpu.vector_store %arg2[%c0_4, %c0_5], %7 {strides = array<i32>} : memref<1x384xf32, #tpu.memory_space<vmem>>, vector<1x384xf32>,
    %c0_6 = arith.constant 0 : index
    %c0_7 = arith.constant 0 : index
    %9 = vector.load %arg3[%c0_6, %c0_7] : memref<1x384xf32, #tpu.memory_space<vmem>>, vector<1x384xf32>
    %10 = arith.mulf %3, %3 : vector<56x384xf32>
    %cst_8 = arith.constant dense<0.000000e+00> : vector<384xf32>
    %11 = vector.multi_reduction <add>, %10, %cst_8 [0] : vector<56x384xf32> to vector<384xf32>
    %12 = vector.shape_cast %11 : vector<384xf32> to vector<1x384xf32>
    %13 = arith.addf %9, %12 : vector<1x384xf32>
    %c0_9 = arith.constant 0 : index
    %c0_10 = arith.constant 0 : index
    %14 = vector.load %arg3[%c0_9, %c0_10] : memref<1x384xf32, #tpu.memory_space<vmem>>, vector<1x384xf32>
    tpu.vector_store %arg3[%c0_9, %c0_10], %13 {strides = array<i32>} : memref<1x384xf32, #tpu.memory_space<vmem>>, vector<1x384xf32>,
    %c0_i32_11 = arith.constant 0 : i32
    %15 = arith.cmpi eq, %arg0, %c0_i32_11 : i32
    %16 = arith.extui %15 : i1 to i32
    %c0_i32_12 = arith.constant 0 : i32
    %17 = arith.cmpi ne, %16, %c0_i32_12 : i32
    scf.if %17 {
      %c0_13 = arith.constant 0 : index
      %c0_14 = arith.constant 0 : index
      %18 = vector.load %arg2[%c0_13, %c0_14] : memref<1x384xf32, #tpu.memory_space<vmem>>, vector<1x384xf32>
      %cst_15 = arith.constant 2.000000e-02 : f32
      %19 = vector.broadcast %cst_15 : f32 to vector<1x384xf32>
      %20 = arith.mulf %18, %19 : vector<1x384xf32>
      %c0_16 = arith.constant 0 : index
      %c0_17 = arith.constant 0 : index
      %21 = vector.load %arg3[%c0_16, %c0_17] : memref<1x384xf32, #tpu.memory_space<vmem>>, vector<1x384xf32>
      %cst_18 = arith.constant 2.000000e-02 : f32
      %22 = vector.broadcast %cst_18 : f32 to vector<1x384xf32>
      %23 = arith.mulf %21, %22 : vector<1x384xf32>
      %24 = arith.mulf %20, %20 : vector<1x384xf32>
      %25 = arith.subf %23, %24 : vector<1x384xf32>
      %c0_19 = arith.constant 0 : index
      %c0_20 = arith.constant 0 : index
      %26 = vector.load %arg2[%c0_19, %c0_20] : memref<1x384xf32, #tpu.memory_space<vmem>>, vector<1x384xf32>
      tpu.vector_store %arg2[%c0_19, %c0_20], %20 {strides = array<i32>} : memref<1x384xf32, #tpu.memory_space<vmem>>, vector<1x384xf32>,
      %cst_21 = arith.constant 9.99999974E-6 : f32
      %27 = vector.broadcast %cst_21 : f32 to vector<1x384xf32>
      %28 = arith.addf %25, %27 : vector<1x384xf32>
      %29 = math.rsqrt %28 : vector<1x384xf32>
      %c0_22 = arith.constant 0 : index
      %c0_23 = arith.constant 0 : index
      %30 = vector.load %arg3[%c0_22, %c0_23] : memref<1x384xf32, #tpu.memory_space<vmem>>, vector<1x384xf32>
      tpu.vector_store %arg3[%c0_22, %c0_23], %29 {strides = array<i32>} : memref<1x384xf32, #tpu.memory_space<vmem>>, vector<1x384xf32>,
    } else {
    }
    return
  }
  func.func @transform_0(%arg0: i32) -> (i32, i32) {
    %c0_i32 = arith.constant 0 : i32
    %c0_i32_0 = arith.constant 0 : i32
    return %arg0, %c0_i32 : i32, i32
  }
  func.func @transform_1(%arg0: i32) -> (i32, i32) {
    %c0_i32 = arith.constant 0 : i32
    %c0_i32_0 = arith.constant 0 : i32
    %c0_i32_1 = arith.constant 0 : i32
    return %c0_i32, %c0_i32_0 : i32, i32
  }
  func.func @transform_2(%arg0: i32) -> (i32, i32) {
    %c0_i32 = arith.constant 0 : i32
    %c0_i32_0 = arith.constant 0 : i32
    %c0_i32_1 = arith.constant 0 : i32
    return %c0_i32, %c0_i32_0 : i32, i32
  }
}

module attributes {stable_mosaic.version = 11 : i64} {
  func.func @block1_kernel(%arg0: i32, %arg1: memref<56x384xf32, #tpu.memory_space<vmem>>, %arg2: memref<1x384xf32, #tpu.memory_space<vmem>>, %arg3: memref<1x384xf32, #tpu.memory_space<vmem>>, %arg4: memref<1x384xf32, #tpu.memory_space<vmem>>, %arg5: memref<1x384xf32, #tpu.memory_space<vmem>>, %arg6: memref<384x256xbf16, #tpu.memory_space<vmem>>, %arg7: memref<56x256xf32, #tpu.memory_space<vmem>>, %arg8: memref<1x256xf32, #tpu.memory_space<vmem>>, %arg9: memref<1x256xf32, #tpu.memory_space<vmem>>) attributes {dimension_semantics = [#tpu.dimension_semantics<arbitrary>], iteration_bounds = array<i64: 1>, scalar_prefetch = 0 : i64, scratch_operands = 0 : i64, tpu.core_type = #tpu.core_type<tc>, window_params = [{transform_indices = @transform_0, window_bounds = array<i64: 56, 384>}, {pipeline_mode = #tpu.pipeline_mode<synchronous>, transform_indices = @transform_1, window_bounds = array<i64: 1, 384>}, {pipeline_mode = #tpu.pipeline_mode<synchronous>, transform_indices = @transform_2, window_bounds = array<i64: 1, 384>}, {pipeline_mode = #tpu.pipeline_mode<synchronous>, transform_indices = @transform_3, window_bounds = array<i64: 1, 384>}, {pipeline_mode = #tpu.pipeline_mode<synchronous>, transform_indices = @transform_4, window_bounds = array<i64: 1, 384>}, {pipeline_mode = #tpu.pipeline_mode<synchronous>, transform_indices = @transform_5, window_bounds = array<i64: 384, 256>}, {transform_indices = @transform_6, window_bounds = array<i64: 56, 256>}, {pipeline_mode = #tpu.pipeline_mode<synchronous>, transform_indices = @transform_7, window_bounds = array<i64: 1, 256>}, {pipeline_mode = #tpu.pipeline_mode<synchronous>, transform_indices = @transform_8, window_bounds = array<i64: 1, 256>}]} {
    %c0_i32 = arith.constant 0 : i32
    %0 = arith.cmpi eq, %arg0, %c0_i32 : i32
    %1 = arith.extui %0 : i1 to i32
    %c0_i32_0 = arith.constant 0 : i32
    %2 = arith.cmpi ne, %1, %c0_i32_0 : i32
    scf.if %2 {
      %cst_28 = arith.constant 0.000000e+00 : f32
      %46 = vector.broadcast %cst_28 : f32 to vector<1x256xf32>
      %c0_29 = arith.constant 0 : index
      %c0_30 = arith.constant 0 : index
      %47 = vector.load %arg8[%c0_29, %c0_30] : memref<1x256xf32, #tpu.memory_space<vmem>>, vector<1x256xf32>
      tpu.vector_store %arg8[%c0_29, %c0_30], %46 {strides = array<i32>} : memref<1x256xf32, #tpu.memory_space<vmem>>, vector<1x256xf32>,
      %cst_31 = arith.constant 0.000000e+00 : f32
      %48 = vector.broadcast %cst_31 : f32 to vector<1x256xf32>
      %c0_32 = arith.constant 0 : index
      %c0_33 = arith.constant 0 : index
      %49 = vector.load %arg9[%c0_32, %c0_33] : memref<1x256xf32, #tpu.memory_space<vmem>>, vector<1x256xf32>
      tpu.vector_store %arg9[%c0_32, %c0_33], %48 {strides = array<i32>} : memref<1x256xf32, #tpu.memory_space<vmem>>, vector<1x256xf32>,
    } else {
    }
    %c0 = arith.constant 0 : index
    %c0_1 = arith.constant 0 : index
    %3 = vector.load %arg1[%c0, %c0_1] : memref<56x384xf32, #tpu.memory_space<vmem>>, vector<56x384xf32>
    %c0_2 = arith.constant 0 : index
    %c0_3 = arith.constant 0 : index
    %4 = vector.load %arg2[%c0_2, %c0_3] : memref<1x384xf32, #tpu.memory_space<vmem>>, vector<1x384xf32>
    %5 = vector.broadcast %4 : vector<1x384xf32> to vector<56x384xf32>
    %6 = arith.subf %3, %5 : vector<56x384xf32>
    %c0_4 = arith.constant 0 : index
    %c0_5 = arith.constant 0 : index
    %7 = vector.load %arg3[%c0_4, %c0_5] : memref<1x384xf32, #tpu.memory_space<vmem>>, vector<1x384xf32>
    %8 = vector.broadcast %7 : vector<1x384xf32> to vector<56x384xf32>
    %9 = arith.mulf %6, %8 : vector<56x384xf32>
    %c0_6 = arith.constant 0 : index
    %c0_7 = arith.constant 0 : index
    %10 = vector.load %arg4[%c0_6, %c0_7] : memref<1x384xf32, #tpu.memory_space<vmem>>, vector<1x384xf32>
    %11 = vector.broadcast %10 : vector<1x384xf32> to vector<56x384xf32>
    %12 = arith.mulf %9, %11 : vector<56x384xf32>
    %c0_8 = arith.constant 0 : index
    %c0_9 = arith.constant 0 : index
    %13 = vector.load %arg5[%c0_8, %c0_9] : memref<1x384xf32, #tpu.memory_space<vmem>>, vector<1x384xf32>
    %14 = vector.broadcast %13 : vector<1x384xf32> to vector<56x384xf32>
    %15 = arith.addf %12, %14 : vector<56x384xf32>
    %cst = arith.constant 0.000000e+00 : f32
    %16 = vector.broadcast %cst : f32 to vector<56x384xf32>
    %17 = arith.maximumf %15, %16 : vector<56x384xf32>
    %18 = arith.truncf %17 : vector<56x384xf32> to vector<56x384xbf16>
    %c0_10 = arith.constant 0 : index
    %c0_11 = arith.constant 0 : index
    %19 = vector.load %arg6[%c0_10, %c0_11] : memref<384x256xbf16, #tpu.memory_space<vmem>>, vector<384x256xbf16>
    %cst_12 = arith.constant dense<0.000000e+00> : vector<56x256xf32>
    %20 = tpu.matmul %18, %19, %cst_12 {dimension_numbers = #tpu.dot_dimension_numbers<[1], [0], [0], [1], [0, 0, 1, 1], [], []>} : vector<56x384xbf16>, vector<384x256xbf16>, vector<56x256xf32> -> vector<56x256xf32>
    %c0_13 = arith.constant 0 : index
    %c0_14 = arith.constant 0 : index
    %21 = vector.load %arg7[%c0_13, %c0_14] : memref<56x256xf32, #tpu.memory_space<vmem>>, vector<56x256xf32>
    tpu.vector_store %arg7[%c0_13, %c0_14], %20 {strides = array<i32>} : memref<56x256xf32, #tpu.memory_space<vmem>>, vector<56x256xf32>,
    %c56_i32 = arith.constant 56 : i32
    %22 = arith.muli %arg0, %c56_i32 : i32
    %23 = tpu.iota {dimensions = array<i32: 0>} : vector<56x1xi32>
    %24 = vector.broadcast %22 : i32 to vector<56x1xi32>
    %25 = arith.addi %24, %23 : vector<56x1xi32>
    %c50_i32 = arith.constant 50 : i32
    %26 = vector.broadcast %c50_i32 : i32 to vector<56x1xi32>
    %27 = arith.cmpi slt, %25, %26 : vector<56x1xi32>
    %cst_15 = arith.constant 0.000000e+00 : f32
    %28 = vector.shape_cast %27 : vector<56x1xi1> to vector<56x1xi1>
    %29 = vector.broadcast %28 : vector<56x1xi1> to vector<56x256xi1>
    %30 = vector.broadcast %cst_15 : f32 to vector<56x256xf32>
    %31 = arith.select %29, %20, %30 : vector<56x256xi1>, vector<56x256xf32>
    %c0_16 = arith.constant 0 : index
    %c0_17 = arith.constant 0 : index
    %32 = vector.load %arg8[%c0_16, %c0_17] : memref<1x256xf32, #tpu.memory_space<vmem>>, vector<1x256xf32>
    %cst_18 = arith.constant dense<0.000000e+00> : vector<256xf32>
    %33 = vector.multi_reduction <add>, %31, %cst_18 [0] : vector<56x256xf32> to vector<256xf32>
    %34 = vector.shape_cast %33 : vector<256xf32> to vector<1x256xf32>
    %35 = arith.addf %32, %34 : vector<1x256xf32>
    %c0_19 = arith.constant 0 : index
    %c0_20 = arith.constant 0 : index
    %36 = vector.load %arg8[%c0_19, %c0_20] : memref<1x256xf32, #tpu.memory_space<vmem>>, vector<1x256xf32>
    tpu.vector_store %arg8[%c0_19, %c0_20], %35 {strides = array<i32>} : memref<1x256xf32, #tpu.memory_space<vmem>>, vector<1x256xf32>,
    %c0_21 = arith.constant 0 : index
    %c0_22 = arith.constant 0 : index
    %37 = vector.load %arg9[%c0_21, %c0_22] : memref<1x256xf32, #tpu.memory_space<vmem>>, vector<1x256xf32>
    %38 = arith.mulf %31, %31 : vector<56x256xf32>
    %cst_23 = arith.constant dense<0.000000e+00> : vector<256xf32>
    %39 = vector.multi_reduction <add>, %38, %cst_23 [0] : vector<56x256xf32> to vector<256xf32>
    %40 = vector.shape_cast %39 : vector<256xf32> to vector<1x256xf32>
    %41 = arith.addf %37, %40 : vector<1x256xf32>
    %c0_24 = arith.constant 0 : index
    %c0_25 = arith.constant 0 : index
    %42 = vector.load %arg9[%c0_24, %c0_25] : memref<1x256xf32, #tpu.memory_space<vmem>>, vector<1x256xf32>
    tpu.vector_store %arg9[%c0_24, %c0_25], %41 {strides = array<i32>} : memref<1x256xf32, #tpu.memory_space<vmem>>, vector<1x256xf32>,
    %c0_i32_26 = arith.constant 0 : i32
    %43 = arith.cmpi eq, %arg0, %c0_i32_26 : i32
    %44 = arith.extui %43 : i1 to i32
    %c0_i32_27 = arith.constant 0 : i32
    %45 = arith.cmpi ne, %44, %c0_i32_27 : i32
    scf.if %45 {
      %c0_28 = arith.constant 0 : index
      %c0_29 = arith.constant 0 : index
      %46 = vector.load %arg8[%c0_28, %c0_29] : memref<1x256xf32, #tpu.memory_space<vmem>>, vector<1x256xf32>
      %cst_30 = arith.constant 2.000000e-02 : f32
      %47 = vector.broadcast %cst_30 : f32 to vector<1x256xf32>
      %48 = arith.mulf %46, %47 : vector<1x256xf32>
      %c0_31 = arith.constant 0 : index
      %c0_32 = arith.constant 0 : index
      %49 = vector.load %arg9[%c0_31, %c0_32] : memref<1x256xf32, #tpu.memory_space<vmem>>, vector<1x256xf32>
      %cst_33 = arith.constant 2.000000e-02 : f32
      %50 = vector.broadcast %cst_33 : f32 to vector<1x256xf32>
      %51 = arith.mulf %49, %50 : vector<1x256xf32>
      %52 = arith.mulf %48, %48 : vector<1x256xf32>
      %53 = arith.subf %51, %52 : vector<1x256xf32>
      %c0_34 = arith.constant 0 : index
      %c0_35 = arith.constant 0 : index
      %54 = vector.load %arg8[%c0_34, %c0_35] : memref<1x256xf32, #tpu.memory_space<vmem>>, vector<1x256xf32>
      tpu.vector_store %arg8[%c0_34, %c0_35], %48 {strides = array<i32>} : memref<1x256xf32, #tpu.memory_space<vmem>>, vector<1x256xf32>,
      %cst_36 = arith.constant 9.99999974E-6 : f32
      %55 = vector.broadcast %cst_36 : f32 to vector<1x256xf32>
      %56 = arith.addf %53, %55 : vector<1x256xf32>
      %57 = math.rsqrt %56 : vector<1x256xf32>
      %c0_37 = arith.constant 0 : index
      %c0_38 = arith.constant 0 : index
      %58 = vector.load %arg9[%c0_37, %c0_38] : memref<1x256xf32, #tpu.memory_space<vmem>>, vector<1x256xf32>
      tpu.vector_store %arg9[%c0_37, %c0_38], %57 {strides = array<i32>} : memref<1x256xf32, #tpu.memory_space<vmem>>, vector<1x256xf32>,
    } else {
    }
    return
  }
  func.func @transform_0(%arg0: i32) -> (i32, i32) {
    %c0_i32 = arith.constant 0 : i32
    %c0_i32_0 = arith.constant 0 : i32
    return %arg0, %c0_i32 : i32, i32
  }
  func.func @transform_1(%arg0: i32) -> (i32, i32) {
    %c0_i32 = arith.constant 0 : i32
    %c0_i32_0 = arith.constant 0 : i32
    %c0_i32_1 = arith.constant 0 : i32
    return %c0_i32, %c0_i32_0 : i32, i32
  }
  func.func @transform_2(%arg0: i32) -> (i32, i32) {
    %c0_i32 = arith.constant 0 : i32
    %c0_i32_0 = arith.constant 0 : i32
    %c0_i32_1 = arith.constant 0 : i32
    return %c0_i32, %c0_i32_0 : i32, i32
  }
  func.func @transform_3(%arg0: i32) -> (i32, i32) {
    %c0_i32 = arith.constant 0 : i32
    %c0_i32_0 = arith.constant 0 : i32
    %c0_i32_1 = arith.constant 0 : i32
    return %c0_i32, %c0_i32_0 : i32, i32
  }
  func.func @transform_4(%arg0: i32) -> (i32, i32) {
    %c0_i32 = arith.constant 0 : i32
    %c0_i32_0 = arith.constant 0 : i32
    %c0_i32_1 = arith.constant 0 : i32
    return %c0_i32, %c0_i32_0 : i32, i32
  }
  func.func @transform_5(%arg0: i32) -> (i32, i32) {
    %c0_i32 = arith.constant 0 : i32
    %c0_i32_0 = arith.constant 0 : i32
    %c0_i32_1 = arith.constant 0 : i32
    return %c0_i32, %c0_i32_0 : i32, i32
  }
  func.func @transform_6(%arg0: i32) -> (i32, i32) {
    %c0_i32 = arith.constant 0 : i32
    %c0_i32_0 = arith.constant 0 : i32
    return %arg0, %c0_i32 : i32, i32
  }
  func.func @transform_7(%arg0: i32) -> (i32, i32) {
    %c0_i32 = arith.constant 0 : i32
    %c0_i32_0 = arith.constant 0 : i32
    %c0_i32_1 = arith.constant 0 : i32
    return %c0_i32, %c0_i32_0 : i32, i32
  }
  func.func @transform_8(%arg0: i32) -> (i32, i32) {
    %c0_i32 = arith.constant 0 : i32
    %c0_i32_0 = arith.constant 0 : i32
    %c0_i32_1 = arith.constant 0 : i32
    return %c0_i32, %c0_i32_0 : i32, i32
  }
}

module attributes {stable_mosaic.version = 11 : i64} {
  func.func @block2_kernel(%arg0: i32, %arg1: memref<56x256xf32, #tpu.memory_space<vmem>>, %arg2: memref<1x256xf32, #tpu.memory_space<vmem>>, %arg3: memref<1x256xf32, #tpu.memory_space<vmem>>, %arg4: memref<1x256xf32, #tpu.memory_space<vmem>>, %arg5: memref<1x256xf32, #tpu.memory_space<vmem>>, %arg6: memref<256x256xbf16, #tpu.memory_space<vmem>>, %arg7: memref<56x256xf32, #tpu.memory_space<vmem>>, %arg8: memref<56x256xf32, #tpu.memory_space<vmem>>) attributes {dimension_semantics = [#tpu.dimension_semantics<parallel>], iteration_bounds = array<i64: 1>, scalar_prefetch = 0 : i64, scratch_operands = 0 : i64, tpu.core_type = #tpu.core_type<tc>, window_params = [{transform_indices = @transform_0, window_bounds = array<i64: 56, 256>}, {pipeline_mode = #tpu.pipeline_mode<synchronous>, transform_indices = @transform_1, window_bounds = array<i64: 1, 256>}, {pipeline_mode = #tpu.pipeline_mode<synchronous>, transform_indices = @transform_2, window_bounds = array<i64: 1, 256>}, {pipeline_mode = #tpu.pipeline_mode<synchronous>, transform_indices = @transform_3, window_bounds = array<i64: 1, 256>}, {pipeline_mode = #tpu.pipeline_mode<synchronous>, transform_indices = @transform_4, window_bounds = array<i64: 1, 256>}, {pipeline_mode = #tpu.pipeline_mode<synchronous>, transform_indices = @transform_5, window_bounds = array<i64: 256, 256>}, {transform_indices = @transform_6, window_bounds = array<i64: 56, 256>}, {transform_indices = @transform_7, window_bounds = array<i64: 56, 256>}]} {
    %c0 = arith.constant 0 : index
    %c0_0 = arith.constant 0 : index
    %0 = vector.load %arg1[%c0, %c0_0] : memref<56x256xf32, #tpu.memory_space<vmem>>, vector<56x256xf32>
    %c0_1 = arith.constant 0 : index
    %c0_2 = arith.constant 0 : index
    %1 = vector.load %arg2[%c0_1, %c0_2] : memref<1x256xf32, #tpu.memory_space<vmem>>, vector<1x256xf32>
    %2 = vector.broadcast %1 : vector<1x256xf32> to vector<56x256xf32>
    %3 = arith.subf %0, %2 : vector<56x256xf32>
    %c0_3 = arith.constant 0 : index
    %c0_4 = arith.constant 0 : index
    %4 = vector.load %arg3[%c0_3, %c0_4] : memref<1x256xf32, #tpu.memory_space<vmem>>, vector<1x256xf32>
    %5 = vector.broadcast %4 : vector<1x256xf32> to vector<56x256xf32>
    %6 = arith.mulf %3, %5 : vector<56x256xf32>
    %c0_5 = arith.constant 0 : index
    %c0_6 = arith.constant 0 : index
    %7 = vector.load %arg4[%c0_5, %c0_6] : memref<1x256xf32, #tpu.memory_space<vmem>>, vector<1x256xf32>
    %8 = vector.broadcast %7 : vector<1x256xf32> to vector<56x256xf32>
    %9 = arith.mulf %6, %8 : vector<56x256xf32>
    %c0_7 = arith.constant 0 : index
    %c0_8 = arith.constant 0 : index
    %10 = vector.load %arg5[%c0_7, %c0_8] : memref<1x256xf32, #tpu.memory_space<vmem>>, vector<1x256xf32>
    %11 = vector.broadcast %10 : vector<1x256xf32> to vector<56x256xf32>
    %12 = arith.addf %9, %11 : vector<56x256xf32>
    %c0_9 = arith.constant 0 : index
    %c0_10 = arith.constant 0 : index
    %13 = vector.load %arg7[%c0_9, %c0_10] : memref<56x256xf32, #tpu.memory_space<vmem>>, vector<56x256xf32>
    tpu.vector_store %arg7[%c0_9, %c0_10], %12 {strides = array<i32>} : memref<56x256xf32, #tpu.memory_space<vmem>>, vector<56x256xf32>,
    %14 = arith.truncf %12 : vector<56x256xf32> to vector<56x256xbf16>
    %c0_11 = arith.constant 0 : index
    %c0_12 = arith.constant 0 : index
    %15 = vector.load %arg6[%c0_11, %c0_12] : memref<256x256xbf16, #tpu.memory_space<vmem>>, vector<256x256xbf16>
    %cst = arith.constant dense<0.000000e+00> : vector<56x256xf32>
    %16 = tpu.matmul %14, %15, %cst {dimension_numbers = #tpu.dot_dimension_numbers<[1], [0], [0], [1], [0, 0, 1, 1], [], []>} : vector<56x256xbf16>, vector<256x256xbf16>, vector<56x256xf32> -> vector<56x256xf32>
    %c0_13 = arith.constant 0 : index
    %c0_14 = arith.constant 0 : index
    %17 = vector.load %arg8[%c0_13, %c0_14] : memref<56x256xf32, #tpu.memory_space<vmem>>, vector<56x256xf32>
    tpu.vector_store %arg8[%c0_13, %c0_14], %16 {strides = array<i32>} : memref<56x256xf32, #tpu.memory_space<vmem>>, vector<56x256xf32>,
    return
  }
  func.func @transform_0(%arg0: i32) -> (i32, i32) {
    %c0_i32 = arith.constant 0 : i32
    %c0_i32_0 = arith.constant 0 : i32
    return %arg0, %c0_i32 : i32, i32
  }
  func.func @transform_1(%arg0: i32) -> (i32, i32) {
    %c0_i32 = arith.constant 0 : i32
    %c0_i32_0 = arith.constant 0 : i32
    %c0_i32_1 = arith.constant 0 : i32
    return %c0_i32, %c0_i32_0 : i32, i32
  }
  func.func @transform_2(%arg0: i32) -> (i32, i32) {
    %c0_i32 = arith.constant 0 : i32
    %c0_i32_0 = arith.constant 0 : i32
    %c0_i32_1 = arith.constant 0 : i32
    return %c0_i32, %c0_i32_0 : i32, i32
  }
  func.func @transform_3(%arg0: i32) -> (i32, i32) {
    %c0_i32 = arith.constant 0 : i32
    %c0_i32_0 = arith.constant 0 : i32
    %c0_i32_1 = arith.constant 0 : i32
    return %c0_i32, %c0_i32_0 : i32, i32
  }
  func.func @transform_4(%arg0: i32) -> (i32, i32) {
    %c0_i32 = arith.constant 0 : i32
    %c0_i32_0 = arith.constant 0 : i32
    %c0_i32_1 = arith.constant 0 : i32
    return %c0_i32, %c0_i32_0 : i32, i32
  }
  func.func @transform_5(%arg0: i32) -> (i32, i32) {
    %c0_i32 = arith.constant 0 : i32
    %c0_i32_0 = arith.constant 0 : i32
    %c0_i32_1 = arith.constant 0 : i32
    return %c0_i32, %c0_i32_0 : i32, i32
  }
  func.func @transform_6(%arg0: i32) -> (i32, i32) {
    %c0_i32 = arith.constant 0 : i32
    %c0_i32_0 = arith.constant 0 : i32
    return %arg0, %c0_i32 : i32, i32
  }
  func.func @transform_7(%arg0: i32) -> (i32, i32) {
    %c0_i32 = arith.constant 0 : i32
    %c0_i32_0 = arith.constant 0 : i32
    return %arg0, %c0_i32 : i32, i32
  }
}

</mosaic_0001>

<llo_original>
// kernel: class_block_forward.3
$region0: #{class_block_forward.3}
  #allocation0 [shape = 'u32[]', space=smem, size = 0x4, offset = 0x4, fixed_abs, tag = 'smem constant byte address 0x4 - core index']
  #allocation1 [shape = 'u32[144,128]{1,0:T(1,128)}', space=vmem, size = 0x12000, scoped, tag = 'internal scratch']
  %s0 = inlined_call_operand.vmem [shape: f32[56,384], index: 0, kind: input, shape index: {}]
  %s1 = inlined_call_operand.vmem [shape: f32[1,384], index: 1, kind: output, shape index: {0}]
  %s2 = inlined_call_operand.vmem [shape: f32[1,384], index: 2, kind: output, shape index: {1}]
  %3 = xla_tuple %s1, %s2
  %s4 = sld [smem:[#allocation0]]
  $region30: #{class_block_forward.3} parent=0
    _
  %s6 = ssub.s32 1, %s4
  %s7 = scalar_select 0, %s6, %s4
  // Predicated region
  $region2: #{class_block_forward.3} parent=0 // pred_check
    _
  $region3: #{class_block_forward.3} parent=0 // pred_check_branch
    %9 = sbr.rel (0) target = $region5
  $region4: #{class_block_forward.3} parent=0 // pred_region
    _
  $region5: #{class_block_forward.3} parent=0 // pred_fallthru
    _
  %p10 = scmp.eq.s32.totalorder 0, 0
  // Predicated region
  $region6: #{class_block_forward.3} parent=0 // pred_check
    %p11 = pneg %p10
  $region7: #{class_block_forward.3} parent=0 // pred_check_branch
    %13 = sbr.rel (%p11) target = $region9
  $region8: #{class_block_forward.3} parent=0 // pred_region
    %v14 = vlaneseq
    %vm15 = vcmp.ge.s32.totalorder %v14, 0
    %vm16 = vcmp.lt.s32.totalorder %v14, 384
    %vm17 = vmand %vm15, %vm16
    %18 = vst.msk [vmem:[%s1] sm:$0x7] %vm17, 0.0
    %19 = vst.msk [vmem:[%s2] sm:$0x7] %vm17, 0.0
  $region9: #{class_block_forward.3} parent=0 // pred_fallthru
    _
  %v20 = vld [vmem:[%s0] sm:$0xff]
  %v21 = vld [vmem:[%s0 + $0x8] sm:$0xff]
  %v22 = vld [vmem:[%s0 + $0x10] sm:$0xff]
  %v23 = vld [vmem:[%s0 + $0x18] sm:$0xff]
  %v24 = vld [vmem:[%s0 + $0x20] sm:$0xff]
  %v25 = vld [vmem:[%s0 + $0x28] sm:$0xff]
  %v26 = vld [vmem:[%s0 + $0x30] sm:$0xff]
  %v27 = vld [vmem:[%s0 + $0x38] sm:$0xff]
  %v28 = vld [vmem:[%s0 + $0x40] sm:$0xff]
  %v29 = vld [vmem:[%s0 + $0x48] sm:$0xff]
  %v30 = vld [vmem:[%s0 + $0x50] sm:$0xff]
  %v31 = vld [vmem:[%s0 + $0x58] sm:$0xff]
  %v32 = vld [vmem:[%s0 + $0x60] sm:$0xff]
  %v33 = vld [vmem:[%s0 + $0x68] sm:$0xff]
  %v34 = vld [vmem:[%s0 + $0x70] sm:$0xff]
  %v35 = vld [vmem:[%s0 + $0x78] sm:$0xff]
  %v36 = vld [vmem:[%s0 + $0x80] sm:$0xff]
  %v37 = vld [vmem:[%s0 + $0x88] sm:$0xff]
  %v38 = vld [vmem:[%s0 + $0x90] sm:$0xff]
  %v39 = vld [vmem:[%s0 + $0x98] sm:$0xff]
  %v40 = vld [vmem:[%s0 + $0xa0] sm:$0xff]
  %v41 = vld [vmem:[%s1] sm:$0x7]
  %v42 = vadd.f32 %v20, %v23
  %v43 = vadd.f32 %v42, %v26
  %v44 = vadd.f32 %v43, %v29
  %v45 = vadd.f32 %v44, %v32
  %v46 = vadd.f32 %v45, %v35
  %v47 = vadd.f32 %v46, %v38
  %v48 = vrot.slane %v47, 4
  %v49 = vadd.f32 %v47, %v48
  %v50 = vrot.slane %v49, 2
  %v51 = vadd.f32 %v49, %v50
  %v52 = vrot.slane %v51, 1
  %v53 = vadd.f32 %v51, %v52
  %v54 = vadd.f32 %v21, %v24
  %v55 = vadd.f32 %v54, %v27
  %v56 = vadd.f32 %v55, %v30
  %v57 = vadd.f32 %v56, %v33
  %v58 = vadd.f32 %v57, %v36
  %v59 = vadd.f32 %v58, %v39
  %v60 = vrot.slane %v59, 4
  %v61 = vadd.f32 %v59, %v60
  %v62 = vrot.slane %v61, 2
  %v63 = vadd.f32 %v61, %v62
  %v64 = vrot.slane %v63, 1
  %v65 = vadd.f32 %v63, %v64
  %v66 = vadd.f32 %v22, %v25
  %v67 = vadd.f32 %v66, %v28
  %v68 = vadd.f32 %v67, %v31
  %v69 = vadd.f32 %v68, %v34
  %v70 = vadd.f32 %v69, %v37
  %v71 = vadd.f32 %v70, %v40
  %v72 = vrot.slane %v71, 4
  %v73 = vadd.f32 %v71, %v72
  %v74 = vrot.slane %v73, 2
  %v75 = vadd.f32 %v73, %v74
  %v76 = vrot.slane %v75, 1
  %v77 = vadd.f32 %v75, %v76
  %v81 = vcombine.low %v53, %v65
  %v83 = vunpack.c.l.s4 1966171168
  %v84 = vunpack.c.0.s8 %v83
  %v85 = vlaneseq
  %v86 = vshrl.u32 %v85, 7
  %v87 = vsub.s32 %v84, %v86
  %v88 = vrot.slane %v81, %v87
  %v90 = vunpack.c.l.s4 1966171168
  %v91 = vunpack.c.0.s8 %v90
  %v92 = vlaneseq
  %v93 = vshrl.u32 %v92, 7
  %v94 = vsub.s32 %v91, %v93
  %v95 = vrot.slane %v77, %v94
  %v96 = vcombine.low %v88, %v95
  %v98 = vunpack.c.l.s4 1966171168
  %v99 = vunpack.c.0.s8 %v98
  %v100 = vlaneseq
  %v101 = vshrl.u32 %v100, 7
  %v102 = vsub.s32 %v99, %v101
  %v103 = vrot.slane %v96, %v102
  %v105 = vadd.f32 %v41, %v103
  %v106 = vlaneseq
  %vm107 = vcmp.ge.s32.totalorder %v106, 0
  %vm108 = vcmp.lt.s32.totalorder %v106, 384
  %vm109 = vmand %vm107, %vm108
  %110 = vst.msk [vmem:[%s1] sm:$0x7] %vm109, %v105
  %v111 = vld [vmem:[%s2] sm:$0x7]
  %v112 = vmul.f32 %v20, %v20
  %v113 = vmul.f32 %v21, %v21
  %v114 = vmul.f32 %v22, %v22
  %v115 = vmul.f32 %v23, %v23
  %v116 = vmul.f32 %v24, %v24
  %v117 = vmul.f32 %v25, %v25
  %v118 = vmul.f32 %v26, %v26
  %v119 = vmul.f32 %v27, %v27
  %v120 = vmul.f32 %v28, %v28
  %v121 = vmul.f32 %v29, %v29
  %v122 = vmul.f32 %v30, %v30
  %v123 = vmul.f32 %v31, %v31
  %v124 = vmul.f32 %v32, %v32
  %v125 = vmul.f32 %v33, %v33
  %v126 = vmul.f32 %v34, %v34
  %v127 = vmul.f32 %v35, %v35
  %v128 = vmul.f32 %v36, %v36
  %v129 = vmul.f32 %v37, %v37
  %v130 = vmul.f32 %v38, %v38
  %v131 = vmul.f32 %v39, %v39
  %v132 = vmul.f32 %v40, %v40
  %v133 = vadd.f32 %v112, %v115
  %v134 = vadd.f32 %v133, %v118
  %v135 = vadd.f32 %v134, %v121
  %v136 = vadd.f32 %v135, %v124
  %v137 = vadd.f32 %v136, %v127
  %v138 = vadd.f32 %v137, %v130
  %v139 = vrot.slane %v138, 4
  %v140 = vadd.f32 %v138, %v139
  %v141 = vrot.slane %v140, 2
  %v142 = vadd.f32 %v140, %v141
  %v143 = vrot.slane %v142, 1
  %v144 = vadd.f32 %v142, %v143
  %v145 = vadd.f32 %v113, %v116
  %v146 = vadd.f32 %v145, %v119
  %v147 = vadd.f32 %v146, %v122
  %v148 = vadd.f32 %v147, %v125
  %v149 = vadd.f32 %v148, %v128
  %v150 = vadd.f32 %v149, %v131
  %v151 = vrot.slane %v150, 4
  %v152 = vadd.f32 %v150, %v151
  %v153 = vrot.slane %v152, 2
  %v154 = vadd.f32 %v152, %v153
  %v155 = vrot.slane %v154, 1
  %v156 = vadd.f32 %v154, %v155
  %v157 = vadd.f32 %v114, %v117
  %v158 = vadd.f32 %v157, %v120
  %v159 = vadd.f32 %v158, %v123
  %v160 = vadd.f32 %v159, %v126
  %v161 = vadd.f32 %v160, %v129
  %v162 = vadd.f32 %v161, %v132
  %v163 = vrot.slane %v162, 4
  %v164 = vadd.f32 %v162, %v163
  %v165 = vrot.slane %v164, 2
  %v166 = vadd.f32 %v164, %v165
  %v167 = vrot.slane %v166, 1
  %v168 = vadd.f32 %v166, %v167
  %v172 = vcombine.low %v144, %v156
  %v174 = vunpack.c.l.s4 1966171168
  %v175 = vunpack.c.0.s8 %v174
  %v176 = vlaneseq
  %v177 = vshrl.u32 %v176, 7
  %v178 = vsub.s32 %v175, %v177
  %v179 = vrot.slane %v172, %v178
  %v181 = vunpack.c.l.s4 1966171168
  %v182 = vunpack.c.0.s8 %v181
  %v183 = vlaneseq
  %v184 = vshrl.u32 %v183, 7
  %v185 = vsub.s32 %v182, %v184
  %v186 = vrot.slane %v168, %v185
  %v187 = vcombine.low %v179, %v186
  %v189 = vunpack.c.l.s4 1966171168
  %v190 = vunpack.c.0.s8 %v189
  %v191 = vlaneseq
  %v192 = vshrl.u32 %v191, 7
  %v193 = vsub.s32 %v190, %v192
  %v194 = vrot.slane %v187, %v193
  %v196 = vadd.f32 %v111, %v194
  %197 = vst.msk [vmem:[%s2] sm:$0x7] %vm109, %v196
  // Predicated region
  $region10: #{class_block_forward.3} parent=0 // pred_check
    %p198 = pneg %p10
  $region11: #{class_block_forward.3} parent=0 // pred_check_branch
    %200 = sbr.rel (%p198) target = $region13
  $region12: #{class_block_forward.3} parent=0 // pred_region
    %v201 = vld [vmem:[%s1] sm:$0x7]
    %v202 = vmul.f32 %v201, 0.02
    %v203 = vld [vmem:[%s2] sm:$0x7]
    %v204 = vmul.f32 %v203, 0.02
    %v205 = vmul.f32 %v202, %v202
    %v206 = vsub.f32 %v204, %v205
    %207 = vst.msk [vmem:[%s1] sm:$0x7] %vm109, %v202
    %v208 = vadd.f32 %v206, 1e-05
    %v209 = vrsqrt.pop %v208
    %210 = vst.msk [vmem:[%s2] sm:$0x7] %vm109, %v209
  $region13: #{class_block_forward.3} parent=0 // pred_fallthru
    _
  // Predicated region
  $region14: #{class_block_forward.3} parent=0 // pred_check
    _
  $region15: #{class_block_forward.3} parent=0 // pred_check_branch
    %212 = sbr.rel (0) target = $region17
  $region16: #{class_block_forward.3} parent=0 // pred_region
    _
  $region17: #{class_block_forward.3} parent=0 // pred_fallthru
    _
  // Predicated region
  $region18: #{class_block_forward.3} parent=0 // pred_check
    _
  $region19: #{class_block_forward.3} parent=0 // pred_check_branch
    %214 = sbr.rel (0) target = $region21
  $region20: #{class_block_forward.3} parent=0 // pred_region
    _
  $region21: #{class_block_forward.3} parent=0 // pred_fallthru
    _
  // Predicated region
  $region22: #{class_block_forward.3} parent=0 // pred_check
    _
  $region23: #{class_block_forward.3} parent=0 // pred_check_branch
    %216 = sbr.rel (0) target = $region25
  $region24: #{class_block_forward.3} parent=0 // pred_region
    _
  $region25: #{class_block_forward.3} parent=0 // pred_fallthru
    _
  // Predicated region
  $region26: #{class_block_forward.3} parent=0 // pred_check
    _
  $region27: #{class_block_forward.3} parent=0 // pred_check_branch
    %218 = sbr.rel (0) target = $region29
  $region28: #{class_block_forward.3} parent=0 // pred_region
    _
  $region29: #{class_block_forward.3} parent=0 // pred_fallthru
    _

// kernel: class_block_forward.5
$region0: #{class_block_forward.5}
  #allocation0 [shape = 'u32[]', space=smem, size = 0x4, offset = 0x4, fixed_abs, tag = 'smem constant byte address 0x4 - core index']
  #allocation1 [shape = 'u32[144,128]{1,0:T(1,128)}', space=vmem, size = 0x12000, scoped, tag = 'internal scratch']
  %s0 = inlined_call_operand.vmem [shape: f32[56,256], index: 0, kind: input, shape index: {}]
  %s1 = inlined_call_operand.vmem [shape: f32[1,256], index: 1, kind: input, shape index: {}]
  %s2 = inlined_call_operand.vmem [shape: f32[1,256], index: 2, kind: input, shape index: {}]
  %s3 = inlined_call_operand.vmem [shape: f32[1,256], index: 3, kind: input, shape index: {}]
  %s4 = inlined_call_operand.vmem [shape: f32[1,256], index: 4, kind: input, shape index: {}]
  %s5 = inlined_call_operand.vmem [shape: bf16[256,256], index: 5, kind: input, shape index: {}]
  %s6 = inlined_call_operand.hbm [shape: f32[56,256], index: 6, kind: output, shape index: {0}]
  %s7 = inlined_call_operand.hbm [shape: f32[56,256], index: 7, kind: output, shape index: {1}]
  %8 = xla_tuple %s6, %s7
  %s9 = sld [smem:[#allocation0]]
  $region42: #{class_block_forward.5} parent=0
    _
  %s11 = ssub.s32 1, %s9
  %s12 = scalar_select 0, %s11, %s9
  $region1: #{class_block_forward.5} parent=0
    #allocation2 [shape = 'u8[57344]{0}', space=vmem, size = 0xe000, scoped, tag = 'output window, operand 0, single buffered']
    #allocation3 [shape = 's32[1]{0}', space=sflag, size = 0x4, scoped, tag = 'scoped memory for class_block_forward.5']
    #allocation4 [shape = 'u8[57344]{0}', space=vmem, size = 0xe000, scoped, tag = 'output window, operand 1, single buffered']
    #allocation5 [shape = 's32[1]{0}', space=sflag, size = 0x4, scoped, tag = 'scoped memory for class_block_forward.5']
    %13 = vsyncpa [#allocation3], 0
    %14 = vsyncpa [#allocation5], 0
    // Predicated region
    $region2: #{class_block_forward.5} parent=1 // pred_check
      _
    $region3: #{class_block_forward.5} parent=1 // pred_check_branch
      %16 = sbr.rel (0) target = $region5
    $region4: #{class_block_forward.5} parent=1 // pred_region
      _
    $region5: #{class_block_forward.5} parent=1 // pred_fallthru
      _
    // Predicated region
    $region6: #{class_block_forward.5} parent=1 // pred_check
      _
    $region7: #{class_block_forward.5} parent=1 // pred_check_branch
      %18 = sbr.rel (0) target = $region9
    $region8: #{class_block_forward.5} parent=1 // pred_region
      _
    $region9: #{class_block_forward.5} parent=1 // pred_fallthru
      _
    // Predicated region
    $region10: #{class_block_forward.5} parent=1 // pred_check
      _
    $region11: #{class_block_forward.5} parent=1 // pred_check_branch
      %20 = sbr.rel (0) target = $region13
    $region12: #{class_block_forward.5} parent=1 // pred_region
      _
    $region13: #{class_block_forward.5} parent=1 // pred_fallthru
      _
    // Predicated region
    $region14: #{class_block_forward.5} parent=1 // pred_check
      _
    $region15: #{class_block_forward.5} parent=1 // pred_check_branch
      %22 = sbr.rel (0) target = $region17
    $region16: #{class_block_forward.5} parent=1 // pred_region
      _
    $region17: #{class_block_forward.5} parent=1 // pred_fallthru
      _
    // Predicated region
    $region18: #{class_block_forward.5} parent=1 // pred_check
      _
    $region19: #{class_block_forward.5} parent=1 // pred_check_branch
      %24 = sbr.rel (0) target = $region21
    $region20: #{class_block_forward.5} parent=1 // pred_region
      _
    $region21: #{class_block_forward.5} parent=1 // pred_fallthru
      _
    // Predicated region
    $region22: #{class_block_forward.5} parent=1 // pred_check
      _
    $region23: #{class_block_forward.5} parent=1 // pred_check_branch
      %26 = sbr.rel (0) target = $region25
    $region24: #{class_block_forward.5} parent=1 // pred_region
      _
    $region25: #{class_block_forward.5} parent=1 // pred_fallthru
      _
    %v27 = vld [vmem:[%s0] sm:$0xff]
    %v28 = vld [vmem:[%s0 + $0x8] sm:$0xff]
    %v29 = vld [vmem:[%s0 + $0x10] sm:$0xff]
    %v30 = vld [vmem:[%s0 + $0x18] sm:$0xff]
    %v31 = vld [vmem:[%s0 + $0x20] sm:$0xff]
    %v32 = vld [vmem:[%s0 + $0x28] sm:$0xff]
    %v33 = vld [vmem:[%s0 + $0x30] sm:$0xff]
    %v34 = vld [vmem:[%s0 + $0x38] sm:$0xff]
    %v35 = vld [vmem:[%s0 + $0x40] sm:$0xff]
    %v36 = vld [vmem:[%s0 + $0x48] sm:$0xff]
    %v37 = vld [vmem:[%s0 + $0x50] sm:$0xff]
    %v38 = vld [vmem:[%s0 + $0x58] sm:$0xff]
    %v39 = vld [vmem:[%s0 + $0x60] sm:$0xff]
    %v40 = vld [vmem:[%s0 + $0x68] sm:$0xff]
    %v41 = vld [vmem:[%s1] sm:$0x3]
    %v43 = vlaneseq
    %v44 = vshrl.u32 %v43, 7
    %v45 = vsub.s32 0, %v44
    %v46 = vrot.slane %v41, %v45
    %v47 = vlaneseq
    %v48 = vshrl.u32 %v47, 7
    %v49 = vsub.s32 1, %v48
    %v50 = vrot.slane %v41, %v49
    %v53 = vsub.f32 %v27, %v46
    %v54 = vsub.f32 %v28, %v50
    %v55 = vsub.f32 %v29, %v46
    %v56 = vsub.f32 %v30, %v50
    %v57 = vsub.f32 %v31, %v46
    %v58 = vsub.f32 %v32, %v50
    %v59 = vsub.f32 %v33, %v46
    %v60 = vsub.f32 %v34, %v50
    %v61 = vsub.f32 %v35, %v46
    %v62 = vsub.f32 %v36, %v50
    %v63 = vsub.f32 %v37, %v46
    %v64 = vsub.f32 %v38, %v50
    %v65 = vsub.f32 %v39, %v46
    %v66 = vsub.f32 %v40, %v50
    %v67 = vld [vmem:[%s2] sm:$0x3]
    %v69 = vlaneseq
    %v70 = vshrl.u32 %v69, 7
    %v71 = vsub.s32 0, %v70
    %v72 = vrot.slane %v67, %v71
    %v73 = vlaneseq
    %v74 = vshrl.u32 %v73, 7
    %v75 = vsub.s32 1, %v74
    %v76 = vrot.slane %v67, %v75
    %v79 = vmul.f32 %v53, %v72
    %v80 = vmul.f32 %v54, %v76
    %v81 = vmul.f32 %v55, %v72
    %v82 = vmul.f32 %v56, %v76
    %v83 = vmul.f32 %v57, %v72
    %v84 = vmul.f32 %v58, %v76
    %v85 = vmul.f32 %v59, %v72
    %v86 = vmul.f32 %v60, %v76
    %v87 = vmul.f32 %v61, %v72
    %v88 = vmul.f32 %v62, %v76
    %v89 = vmul.f32 %v63, %v72
    %v90 = vmul.f32 %v64, %v76
    %v91 = vmul.f32 %v65, %v72
    %v92 = vmul.f32 %v66, %v76
    %v93 = vld [vmem:[%s3] sm:$0x3]
    %v95 = vlaneseq
    %v96 = vshrl.u32 %v95, 7
    %v97 = vsub.s32 0, %v96
    %v98 = vrot.slane %v93, %v97
    %v99 = vlaneseq
    %v100 = vshrl.u32 %v99, 7
    %v101 = vsub.s32 1, %v100
    %v102 = vrot.slane %v93, %v101
    %v105 = vmul.f32 %v79, %v98
    %v106 = vmul.f32 %v80, %v102
    %v107 = vmul.f32 %v81, %v98
    %v108 = vmul.f32 %v82, %v102
    %v109 = vmul.f32 %v83, %v98
    %v110 = vmul.f32 %v84, %v102
    %v111 = vmul.f32 %v85, %v98
    %v112 = vmul.f32 %v86, %v102
    %v113 = vmul.f32 %v87, %v98
    %v114 = vmul.f32 %v88, %v102
    %v115 = vmul.f32 %v89, %v98
    %v116 = vmul.f32 %v90, %v102
    %v117 = vmul.f32 %v91, %v98
    %v118 = vmul.f32 %v92, %v102
    %v119 = vld [vmem:[%s4] sm:$0x3]
    %v121 = vlaneseq
    %v122 = vshrl.u32 %v121, 7
    %v123 = vsub.s32 0, %v122
    %v124 = vrot.slane %v119, %v123
    %v125 = vlaneseq
    %v126 = vshrl.u32 %v125, 7
    %v127 = vsub.s32 1, %v126
    %v128 = vrot.slane %v119, %v127
    %v131 = vadd.f32 %v105, %v124
    %v132 = vadd.f32 %v106, %v128
    %v133 = vadd.f32 %v107, %v124
    %v134 = vadd.f32 %v108, %v128
    %v135 = vadd.f32 %v109, %v124
    %v136 = vadd.f32 %v110, %v128
    %v137 = vadd.f32 %v111, %v124
    %v138 = vadd.f32 %v112, %v128
    %v139 = vadd.f32 %v113, %v124
    %v140 = vadd.f32 %v114, %v128
    %v141 = vadd.f32 %v115, %v124
    %v142 = vadd.f32 %v116, %v128
    %v143 = vadd.f32 %v117, %v124
    %v144 = vadd.f32 %v118, %v128
    %145 = vst [vmem:[#allocation2] sm:$0xff] %v131
    %146 = vst [vmem:[#allocation2 + $0x8] sm:$0xff] %v132
    %147 = vst [vmem:[#allocation2 + $0x10] sm:$0xff] %v133
    %148 = vst [vmem:[#allocation2 + $0x18] sm:$0xff] %v134
    %149 = vst [vmem:[#allocation2 + $0x20] sm:$0xff] %v135
    %150 = vst [vmem:[#allocation2 + $0x28] sm:$0xff] %v136
    %151 = vst [vmem:[#allocation2 + $0x30] sm:$0xff] %v137
    %152 = vst [vmem:[#allocation2 + $0x38] sm:$0xff] %v138
    %153 = vst [vmem:[#allocation2 + $0x40] sm:$0xff] %v139
    %154 = vst [vmem:[#allocation2 + $0x48] sm:$0xff] %v140
    %155 = vst [vmem:[#allocation2 + $0x50] sm:$0xff] %v141
    %156 = vst [vmem:[#allocation2 + $0x58] sm:$0xff] %v142
    %157 = vst [vmem:[#allocation2 + $0x60] sm:$0xff] %v143
    %158 = vst [vmem:[#allocation2 + $0x68] sm:$0xff] %v144
    %v159 = vpack.c.bf16 %v133, %v131
    %v160 = vpack.c.bf16 %v134, %v132
    %v161 = vpack.c.bf16 %v137, %v135
    %v162 = vpack.c.bf16 %v138, %v136
    %v163 = vpack.c.bf16 %v141, %v139
    %v164 = vpack.c.bf16 %v142, %v140
    %v165 = vpack.c.bf16 %v143, %v143
    %v166 = vpack.c.bf16 %v144, %v144
    %v167 = vld [vmem:[%s5] sm:$0xff]
    %v168 = vld [vmem:[%s5 + $0x8] sm:$0xff]
    %v169 = vld [vmem:[%s5 + $0x10] sm:$0xff]
    %v170 = vld [vmem:[%s5 + $0x18] sm:$0xff]
    %v171 = vld [vmem:[%s5 + $0x20] sm:$0xff]
    %v172 = vld [vmem:[%s5 + $0x28] sm:$0xff]
    %v173 = vld [vmem:[%s5 + $0x30] sm:$0xff]
    %v174 = vld [vmem:[%s5 + $0x38] sm:$0xff]
    %v175 = vld [vmem:[%s5 + $0x40] sm:$0xff]
    %v176 = vld [vmem:[%s5 + $0x48] sm:$0xff]
    %v177 = vld [vmem:[%s5 + $0x50] sm:$0xff]
    %v178 = vld [vmem:[%s5 + $0x58] sm:$0xff]
    %v179 = vld [vmem:[%s5 + $0x60] sm:$0xff]
    %v180 = vld [vmem:[%s5 + $0x68] sm:$0xff]
    %v181 = vld [vmem:[%s5 + $0x70] sm:$0xff]
    %v182 = vld [vmem:[%s5 + $0x78] sm:$0xff]
    %v183 = vld [vmem:[%s5 + $0x80] sm:$0xff]
    %v184 = vld [vmem:[%s5 + $0x88] sm:$0xff]
    %v185 = vld [vmem:[%s5 + $0x90] sm:$0xff]
    %v186 = vld [vmem:[%s5 + $0x98] sm:$0xff]
    %v187 = vld [vmem:[%s5 + $0xa0] sm:$0xff]
    %v188 = vld [vmem:[%s5 + $0xa8] sm:$0xff]
    %v189 = vld [vmem:[%s5 + $0xb0] sm:$0xff]
    %v190 = vld [vmem:[%s5 + $0xb8] sm:$0xff]
    %v191 = vld [vmem:[%s5 + $0xc0] sm:$0xff]
    %v192 = vld [vmem:[%s5 + $0xc8] sm:$0xff]
    %v193 = vld [vmem:[%s5 + $0xd0] sm:$0xff]
    %v194 = vld [vmem:[%s5 + $0xd8] sm:$0xff]
    %v195 = vld [vmem:[%s5 + $0xe0] sm:$0xff]
    %v196 = vld [vmem:[%s5 + $0xe8] sm:$0xff]
    %v197 = vld [vmem:[%s5 + $0xf0] sm:$0xff]
    %v198 = vld [vmem:[%s5 + $0xf8] sm:$0xff]
    %v231 = vunpack.c.l.b16 %v167
    %v232 = vunpack.c.h.b16 %v167
    %v233 = vunpack.c.l.b16 %v168
    %v234 = vunpack.c.h.b16 %v168
    %v235 = vunpack.c.l.b16 %v169
    %v236 = vunpack.c.h.b16 %v169
    %v237 = vunpack.c.l.b16 %v170
    %v238 = vunpack.c.h.b16 %v170
    %v239 = vunpack.c.l.b16 %v171
    %v240 = vunpack.c.h.b16 %v171
    %v241 = vunpack.c.l.b16 %v172
    %v242 = vunpack.c.h.b16 %v172
    %v243 = vunpack.c.l.b16 %v173
    %v244 = vunpack.c.h.b16 %v173
    %v245 = vunpack.c.l.b16 %v174
    %v246 = vunpack.c.h.b16 %v174
    %v247 = vunpack.c.l.b16 %v175
    %v248 = vunpack.c.h.b16 %v175
    %v249 = vunpack.c.l.b16 %v176
    %v250 = vunpack.c.h.b16 %v176
    %v251 = vunpack.c.l.b16 %v177
    %v252 = vunpack.c.h.b16 %v177
    %v253 = vunpack.c.l.b16 %v178
    %v254 = vunpack.c.h.b16 %v178
    %v255 = vunpack.c.l.b16 %v179
    %v256 = vunpack.c.h.b16 %v179
    %v257 = vunpack.c.l.b16 %v180
    %v258 = vunpack.c.h.b16 %v180
    %v259 = vunpack.c.l.b16 %v181
    %v260 = vunpack.c.h.b16 %v181
    %v261 = vunpack.c.l.b16 %v182
    %v262 = vunpack.c.h.b16 %v182
    %v263 = vunpack.c.l.b16 %v183
    %v264 = vunpack.c.h.b16 %v183
    %v265 = vunpack.c.l.b16 %v184
    %v266 = vunpack.c.h.b16 %v184
    %v267 = vunpack.c.l.b16 %v185
    %v268 = vunpack.c.h.b16 %v185
    %v269 = vunpack.c.l.b16 %v186
    %v270 = vunpack.c.h.b16 %v186
    %v271 = vunpack.c.l.b16 %v187
    %v272 = vunpack.c.h.b16 %v187
    %v273 = vunpack.c.l.b16 %v188
    %v274 = vunpack.c.h.b16 %v188
    %v275 = vunpack.c.l.b16 %v189
    %v276 = vunpack.c.h.b16 %v189
    %v277 = vunpack.c.l.b16 %v190
    %v278 = vunpack.c.h.b16 %v190
    %v279 = vunpack.c.l.b16 %v191
    %v280 = vunpack.c.h.b16 %v191
    %v281 = vunpack.c.l.b16 %v192
    %v282 = vunpack.c.h.b16 %v192
    %v283 = vunpack.c.l.b16 %v193
    %v284 = vunpack.c.h.b16 %v193
    %v285 = vunpack.c.l.b16 %v194
    %v286 = vunpack.c.h.b16 %v194
    %v287 = vunpack.c.l.b16 %v195
    %v288 = vunpack.c.h.b16 %v195
    %v289 = vunpack.c.l.b16 %v196
    %v290 = vunpack.c.h.b16 %v196
    %v291 = vunpack.c.l.b16 %v197
    %v292 = vunpack.c.h.b16 %v197
    %v293 = vunpack.c.l.b16 %v198
    %v294 = vunpack.c.h.b16 %v198
    %v295 = vpack.c.b16 %v233, %v231
    %v296 = vpack.c.b16 %v234, %v232
    %v297 = vpack.c.b16 %v237, %v235
    %v298 = vpack.c.b16 %v238, %v236
    %v299 = vpack.c.b16 %v241, %v239
    %v300 = vpack.c.b16 %v242, %v240
    %v301 = vpack.c.b16 %v245, %v243
    %v302 = vpack.c.b16 %v246, %v244
    %v303 = vpack.c.b16 %v249, %v247
    %v304 = vpack.c.b16 %v250, %v248
    %v305 = vpack.c.b16 %v253, %v251
    %v306 = vpack.c.b16 %v254, %v252
    %v307 = vpack.c.b16 %v257, %v255
    %v308 = vpack.c.b16 %v258, %v256
    %v309 = vpack.c.b16 %v261, %v259
    %v310 = vpack.c.b16 %v262, %v260
    %v311 = vpack.c.b16 %v265, %v263
    %v312 = vpack.c.b16 %v266, %v264
    %v313 = vpack.c.b16 %v269, %v267
    %v314 = vpack.c.b16 %v270, %v268
    %v315 = vpack.c.b16 %v273, %v271
    %v316 = vpack.c.b16 %v274, %v272
    %v317 = vpack.c.b16 %v277, %v275
    %v318 = vpack.c.b16 %v278, %v276
    %v319 = vpack.c.b16 %v281, %v279
    %v320 = vpack.c.b16 %v282, %v280
    %v321 = vpack.c.b16 %v285, %v283
    %v322 = vpack.c.b16 %v286, %v284
    %v323 = vpack.c.b16 %v289, %v287
    %v324 = vpack.c.b16 %v290, %v288
    %v325 = vpack.c.b16 %v293, %v291
    %v326 = vpack.c.b16 %v294, %v292
    %359 = vmatprep.subr.bf16.mxu0 %v310
    %360 = vmatpush1.bf16.msra.mxu0 %v309
    %361 = vmatprep.subr.bf16.mxu0 %v308
    %362 = vmatpush1.bf16.msra.mxu0 %v307
    %363 = vmatprep.subr.bf16.mxu0 %v306
    %364 = vmatpush1.bf16.msra.mxu0 %v305
    %365 = vmatprep.subr.bf16.mxu0 %v304
    %366 = vmatpush1.bf16.msra.mxu0 %v303
    %367 = vmatprep.subr.bf16.mxu0 %v302
    %368 = vmatpush1.bf16.msra.mxu0 %v301
    %369 = vmatprep.subr.bf16.mxu0 %v300
    %370 = vmatpush1.bf16.msra.mxu0 %v299
    %371 = vmatprep.subr.bf16.mxu0 %v298
    %372 = vmatpush1.bf16.msra.mxu0 %v297
    %373 = vmatprep.subr.bf16.mxu0 %v296
    %374 = vmatpush1.bf16.msra.mxu0 %v295
    %375 = vmatprep.subr.bf16.mxu0 %v326
    %376 = vmatpush2.bf16.msra.mxu0 %v325
    %377 = vmatprep.subr.bf16.mxu0 %v324
    %378 = vmatpush2.bf16.msra.mxu0 %v323
    %379 = vmatprep.subr.bf16.mxu0 %v322
    %380 = vmatpush2.bf16.msra.mxu0 %v321
    %381 = vmatprep.subr.bf16.mxu0 %v320
    %382 = vmatpush2.bf16.msra.mxu0 %v319
    %383 = vmatprep.subr.bf16.mxu0 %v318
    %384 = vmatpush2.bf16.msra.mxu0 %v317
    %385 = vmatprep.subr.bf16.mxu0 %v316
    %386 = vmatpush2.bf16.msra.mxu0 %v315
    %387 = vmatprep.subr.bf16.mxu0 %v314
    %388 = vmatpush2.bf16.msra.mxu0 %v313
    %389 = vmatprep.subr.bf16.mxu0 %v312
    %390 = vmatpush2.bf16.msra.mxu0 %v311
    %391 = vmatprep.mubr.bf16.mxu0 %v160
    %392 = vmatmul.mubr.bf16.gmra.mxu0 %v159
    %v393 = vpop.f32.mrf.mxu0
    %v394 = vadd.f32 0.0, %v393
    %v395 = vpop.f32.mrf.mxu0
    %v396 = vadd.f32 0.0, %v395
    %v397 = vpop.f32.mrf.mxu0
    %v398 = vadd.f32 0.0, %v397
    %v399 = vpop.f32.mrf.mxu0
    %v400 = vadd.f32 0.0, %v399
    %401 = vmatprep.mubr.bf16.mxu0 %v162
    %402 = vmatmul.mubr.bf16.gmra.mxu0 %v161
    %v403 = vpop.f32.mrf.mxu0
    %v404 = vadd.f32 0.0, %v403
    %v405 = vpop.f32.mrf.mxu0
    %v406 = vadd.f32 0.0, %v405
    %v407 = vpop.f32.mrf.mxu0
    %v408 = vadd.f32 0.0, %v407
    %v409 = vpop.f32.mrf.mxu0
    %v410 = vadd.f32 0.0, %v409
    %411 = vmatprep.mubr.bf16.mxu0 %v164
    %412 = vmatmul.mubr.bf16.gmra.mxu0 %v163
    %v413 = vpop.f32.mrf.mxu0
    %v414 = vadd.f32 0.0, %v413
    %v415 = vpop.f32.mrf.mxu0
    %v416 = vadd.f32 0.0, %v415
    %v417 = vpop.f32.mrf.mxu0
    %v418 = vadd.f32 0.0, %v417
    %v419 = vpop.f32.mrf.mxu0
    %v420 = vadd.f32 0.0, %v419
    %421 = vmatprep.mubr.bf16.mxu0 %v166
    %422 = vmatmul.mubr.bf16.gmra.mxu0 %v165
    %v423 = vpop.f32.mrf.mxu0
    %v424 = vadd.f32 0.0, %v423
    %v425 = vpop.f32.mrf.mxu0
    %v426 = vadd.f32 0.0, %v425
    %v427 = vpop.f32.mrf.mxu0
    %v428 = vpop.f32.mrf.mxu0
    %429 = vdwg.mxu0
    %430 = vst [vmem:[#allocation4] sm:$0xff] %v394
    %431 = vst [vmem:[#allocation4 + $0x8] sm:$0xff] %v396
    %432 = vst [vmem:[#allocation4 + $0x10] sm:$0xff] %v398
    %433 = vst [vmem:[#allocation4 + $0x18] sm:$0xff] %v400
    %434 = vst [vmem:[#allocation4 + $0x20] sm:$0xff] %v404
    %435 = vst [vmem:[#allocation4 + $0x28] sm:$0xff] %v406
    %436 = vst [vmem:[#allocation4 + $0x30] sm:$0xff] %v408
    %437 = vst [vmem:[#allocation4 + $0x38] sm:$0xff] %v410
    %438 = vst [vmem:[#allocation4 + $0x40] sm:$0xff] %v414
    %439 = vst [vmem:[#allocation4 + $0x48] sm:$0xff] %v416
    %440 = vst [vmem:[#allocation4 + $0x50] sm:$0xff] %v418
    %441 = vst [vmem:[#allocation4 + $0x58] sm:$0xff] %v420
    %442 = vst [vmem:[#allocation4 + $0x60] sm:$0xff] %v424
    %443 = vst [vmem:[#allocation4 + $0x68] sm:$0xff] %v426
    // Predicated region
    $region26: #{class_block_forward.5} parent=1 // pred_check
      _
    $region27: #{class_block_forward.5} parent=1 // pred_check_branch
      %445 = sbr.rel (0) target = $region29
    $region28: #{class_block_forward.5} parent=1 // pred_region
      %s447 = ssub.s32 1792, 1792
      %448 = vsyncadd [#allocation3], %s447
      %s449 = sshll.u32 [#allocation2], 4
      %s450 = int_to_ptr.vmem [resolvable:$true] %s449
      %455 = dma.vmem_to_hbm [thread:$0]  %s450, 1792, %s6, [#allocation3], 256, 256, 16
    $region29: #{class_block_forward.5} parent=1 // pred_fallthru
      _
    // Predicated region
    $region30: #{class_block_forward.5} parent=1 // pred_check
      _
    $region31: #{class_block_forward.5} parent=1 // pred_check_branch
      %457 = sbr.rel (0) target = $region33
    $region32: #{class_block_forward.5} parent=1 // pred_region
      %s459 = ssub.s32 1792, 1792
      %460 = vsyncadd [#allocation5], %s459
      %s461 = sshll.u32 [#allocation4], 4
      %s462 = int_to_ptr.vmem [resolvable:$true] %s461
      %467 = dma.vmem_to_hbm [thread:$0]  %s462, 1792, %s7, [#allocation5], 256, 256, 16
    $region33: #{class_block_forward.5} parent=1 // pred_fallthru
      _
    // Predicated region
    $region34: #{class_block_forward.5} parent=1 // pred_check
      _
    $region35: #{class_block_forward.5} parent=1 // pred_check_branch
      %469 = sbr.rel (0) target = $region37
    $region36: #{class_block_forward.5} parent=1 // pred_region
      %470 = dma.done [#allocation3], 1792
    $region37: #{class_block_forward.5} parent=1 // pred_fallthru
      _
    // Predicated region
    $region38: #{class_block_forward.5} parent=1 // pred_check
      _
    $region39: #{class_block_forward.5} parent=1 // pred_check_branch
      %472 = sbr.rel (0) target = $region41
    $region40: #{class_block_forward.5} parent=1 // pred_region
      %473 = dma.done [#allocation5], 1792
    $region41: #{class_block_forward.5} parent=1 // pred_fallthru
      _
    %474 = vsyncpa [#allocation3], 1
    %475 = vsyncpa [#allocation5], 1

// kernel: class_block_forward.4
$region0: #{class_block_forward.4}
  #allocation0 [shape = 'u32[]', space=smem, size = 0x4, offset = 0x4, fixed_abs, tag = 'smem constant byte address 0x4 - core index']
  #allocation1 [shape = 'u32[144,128]{1,0:T(1,128)}', space=vmem, size = 0x12000, scoped, tag = 'internal scratch']
  %s0 = inlined_call_operand.vmem [shape: f32[56,384], index: 0, kind: input, shape index: {}]
  %s1 = inlined_call_operand.vmem [shape: f32[1,384], index: 1, kind: input, shape index: {}]
  %s2 = inlined_call_operand.vmem [shape: f32[1,384], index: 2, kind: input, shape index: {}]
  %s3 = inlined_call_operand.vmem [shape: f32[1,384], index: 3, kind: input, shape index: {}]
  %s4 = inlined_call_operand.vmem [shape: f32[1,384], index: 4, kind: input, shape index: {}]
  %s5 = inlined_call_operand.vmem [shape: bf16[384,256], index: 5, kind: input, shape index: {}]
  %s6 = inlined_call_operand.vmem [shape: f32[56,256], index: 6, kind: output, shape index: {0}]
  %s7 = inlined_call_operand.vmem [shape: f32[1,256], index: 7, kind: output, shape index: {1}]
  %s8 = inlined_call_operand.vmem [shape: f32[1,256], index: 8, kind: output, shape index: {2}]
  %9 = xla_tuple %s6, %s7, %s8
  %s10 = sld [smem:[#allocation0]]
  $region58: #{class_block_forward.4} parent=0
    _
  %s12 = ssub.s32 1, %s10
  %s13 = scalar_select 0, %s12, %s10
  // Predicated region
  $region2: #{class_block_forward.4} parent=0 // pred_check
    _
  $region3: #{class_block_forward.4} parent=0 // pred_check_branch
    %15 = sbr.rel (0) target = $region5
  $region4: #{class_block_forward.4} parent=0 // pred_region
    _
  $region5: #{class_block_forward.4} parent=0 // pred_fallthru
    _
  // Predicated region
  $region6: #{class_block_forward.4} parent=0 // pred_check
    _
  $region7: #{class_block_forward.4} parent=0 // pred_check_branch
    %17 = sbr.rel (0) target = $region9
  $region8: #{class_block_forward.4} parent=0 // pred_region
    _
  $region9: #{class_block_forward.4} parent=0 // pred_fallthru
    _
  // Predicated region
  $region10: #{class_block_forward.4} parent=0 // pred_check
    _
  $region11: #{class_block_forward.4} parent=0 // pred_check_branch
    %19 = sbr.rel (0) target = $region13
  $region12: #{class_block_forward.4} parent=0 // pred_region
    _
  $region13: #{class_block_forward.4} parent=0 // pred_fallthru
    _
  // Predicated region
  $region14: #{class_block_forward.4} parent=0 // pred_check
    _
  $region15: #{class_block_forward.4} parent=0 // pred_check_branch
    %21 = sbr.rel (0) target = $region17
  $region16: #{class_block_forward.4} parent=0 // pred_region
    _
  $region17: #{class_block_forward.4} parent=0 // pred_fallthru
    _
  // Predicated region
  $region18: #{class_block_forward.4} parent=0 // pred_check
    _
  $region19: #{class_block_forward.4} parent=0 // pred_check_branch
    %23 = sbr.rel (0) target = $region21
  $region20: #{class_block_forward.4} parent=0 // pred_region
    _
  $region21: #{class_block_forward.4} parent=0 // pred_fallthru
    _
  // Predicated region
  $region22: #{class_block_forward.4} parent=0 // pred_check
    _
  $region23: #{class_block_forward.4} parent=0 // pred_check_branch
    %25 = sbr.rel (0) target = $region25
  $region24: #{class_block_forward.4} parent=0 // pred_region
    _
  $region25: #{class_block_forward.4} parent=0 // pred_fallthru
    _
  %p27 = scmp.eq.s32.totalorder 0, 0
  // Predicated region
  $region26: #{class_block_forward.4} parent=0 // pred_check
    %p28 = pneg %p27
  $region27: #{class_block_forward.4} parent=0 // pred_check_branch
    %30 = sbr.rel (%p28) target = $region29
  $region28: #{class_block_forward.4} parent=0 // pred_region
    %v31 = vlaneseq
    %vm32 = vcmp.ge.s32.totalorder %v31, 0
    %vm33 = vcmp.lt.s32.totalorder %v31, 256
    %vm34 = vmand %vm32, %vm33
    %35 = vst.msk [vmem:[%s7] sm:$0x3] %vm34, 0.0
    %36 = vst.msk [vmem:[%s8] sm:$0x3] %vm34, 0.0
  $region29: #{class_block_forward.4} parent=0 // pred_fallthru
    _
  %v37 = vld [vmem:[%s0] sm:$0xff]
  %v38 = vld [vmem:[%s0 + $0x8] sm:$0xff]
  %v39 = vld [vmem:[%s0 + $0x10] sm:$0xff]
  %v40 = vld [vmem:[%s0 + $0x18] sm:$0xff]
  %v41 = vld [vmem:[%s0 + $0x20] sm:$0xff]
  %v42 = vld [vmem:[%s0 + $0x28] sm:$0xff]
  %v43 = vld [vmem:[%s0 + $0x30] sm:$0xff]
  %v44 = vld [vmem:[%s0 + $0x38] sm:$0xff]
  %v45 = vld [vmem:[%s0 + $0x40] sm:$0xff]
  %v46 = vld [vmem:[%s0 + $0x48] sm:$0xff]
  %v47 = vld [vmem:[%s0 + $0x50] sm:$0xff]
  %v48 = vld [vmem:[%s0 + $0x58] sm:$0xff]
  %v49 = vld [vmem:[%s0 + $0x60] sm:$0xff]
  %v50 = vld [vmem:[%s0 + $0x68] sm:$0xff]
  %v51 = vld [vmem:[%s0 + $0x70] sm:$0xff]
  %v52 = vld [vmem:[%s0 + $0x78] sm:$0xff]
  %v53 = vld [vmem:[%s0 + $0x80] sm:$0xff]
  %v54 = vld [vmem:[%s0 + $0x88] sm:$0xff]
  %v55 = vld [vmem:[%s0 + $0x90] sm:$0xff]
  %v56 = vld [vmem:[%s0 + $0x98] sm:$0xff]
  %v57 = vld [vmem:[%s0 + $0xa0] sm:$0xff]
  %v58 = vld [vmem:[%s1] sm:$0x7]
  %v60 = vlaneseq
  %v61 = vshrl.u32 %v60, 7
  %v62 = vsub.s32 0, %v61
  %v63 = vrot.slane %v58, %v62
  %v64 = vlaneseq
  %v65 = vshrl.u32 %v64, 7
  %v66 = vsub.s32 1, %v65
  %v67 = vrot.slane %v58, %v66
  %v68 = vlaneseq
  %v69 = vshrl.u32 %v68, 7
  %v70 = vsub.s32 2, %v69
  %v71 = vrot.slane %v58, %v70
  %v75 = vsub.f32 %v37, %v63
  %v76 = vsub.f32 %v38, %v67
  %v77 = vsub.f32 %v39, %v71
  %v78 = vsub.f32 %v40, %v63
  %v79 = vsub.f32 %v41, %v67
  %v80 = vsub.f32 %v42, %v71
  %v81 = vsub.f32 %v43, %v63
  %v82 = vsub.f32 %v44, %v67
  %v83 = vsub.f32 %v45, %v71
  %v84 = vsub.f32 %v46, %v63
  %v85 = vsub.f32 %v47, %v67
  %v86 = vsub.f32 %v48, %v71
  %v87 = vsub.f32 %v49, %v63
  %v88 = vsub.f32 %v50, %v67
  %v89 = vsub.f32 %v51, %v71
  %v90 = vsub.f32 %v52, %v63
  %v91 = vsub.f32 %v53, %v67
  %v92 = vsub.f32 %v54, %v71
  %v93 = vsub.f32 %v55, %v63
  %v94 = vsub.f32 %v56, %v67
  %v95 = vsub.f32 %v57, %v71
  %v96 = vld [vmem:[%s2] sm:$0x7]
  %v98 = vlaneseq
  %v99 = vshrl.u32 %v98, 7
  %v100 = vsub.s32 0, %v99
  %v101 = vrot.slane %v96, %v100
  %v102 = vlaneseq
  %v103 = vshrl.u32 %v102, 7
  %v104 = vsub.s32 1, %v103
  %v105 = vrot.slane %v96, %v104
  %v106 = vlaneseq
  %v107 = vshrl.u32 %v106, 7
  %v108 = vsub.s32 2, %v107
  %v109 = vrot.slane %v96, %v108
  %v113 = vmul.f32 %v75, %v101
  %v114 = vmul.f32 %v76, %v105
  %v115 = vmul.f32 %v77, %v109
  %v116 = vmul.f32 %v78, %v101
  %v117 = vmul.f32 %v79, %v105
  %v118 = vmul.f32 %v80, %v109
  %v119 = vmul.f32 %v81, %v101
  %v120 = vmul.f32 %v82, %v105
  %v121 = vmul.f32 %v83, %v109
  %v122 = vmul.f32 %v84, %v101
  %v123 = vmul.f32 %v85, %v105
  %v124 = vmul.f32 %v86, %v109
  %v125 = vmul.f32 %v87, %v101
  %v126 = vmul.f32 %v88, %v105
  %v127 = vmul.f32 %v89, %v109
  %v128 = vmul.f32 %v90, %v101
  %v129 = vmul.f32 %v91, %v105
  %v130 = vmul.f32 %v92, %v109
  %v131 = vmul.f32 %v93, %v101
  %v132 = vmul.f32 %v94, %v105
  %v133 = vmul.f32 %v95, %v109
  %v134 = vld [vmem:[%s3] sm:$0x7]
  %v136 = vlaneseq
  %v137 = vshrl.u32 %v136, 7
  %v138 = vsub.s32 0, %v137
  %v139 = vrot.slane %v134, %v138
  %v140 = vlaneseq
  %v141 = vshrl.u32 %v140, 7
  %v142 = vsub.s32 1, %v141
  %v143 = vrot.slane %v134, %v142
  %v144 = vlaneseq
  %v145 = vshrl.u32 %v144, 7
  %v146 = vsub.s32 2, %v145
  %v147 = vrot.slane %v134, %v146
  %v151 = vmul.f32 %v113, %v139
  %v152 = vmul.f32 %v114, %v143
  %v153 = vmul.f32 %v115, %v147
  %v154 = vmul.f32 %v116, %v139
  %v155 = vmul.f32 %v117, %v143
  %v156 = vmul.f32 %v118, %v147
  %v157 = vmul.f32 %v119, %v139
  %v158 = vmul.f32 %v120, %v143
  %v159 = vmul.f32 %v121, %v147
  %v160 = vmul.f32 %v122, %v139
  %v161 = vmul.f32 %v123, %v143
  %v162 = vmul.f32 %v124, %v147
  %v163 = vmul.f32 %v125, %v139
  %v164 = vmul.f32 %v126, %v143
  %v165 = vmul.f32 %v127, %v147
  %v166 = vmul.f32 %v128, %v139
  %v167 = vmul.f32 %v129, %v143
  %v168 = vmul.f32 %v130, %v147
  %v169 = vmul.f32 %v131, %v139
  %v170 = vmul.f32 %v132, %v143
  %v171 = vmul.f32 %v133, %v147
  %v172 = vld [vmem:[%s4] sm:$0x7]
  %v174 = vlaneseq
  %v175 = vshrl.u32 %v174, 7
  %v176 = vsub.s32 0, %v175
  %v177 = vrot.slane %v172, %v176
  %v178 = vlaneseq
  %v179 = vshrl.u32 %v178, 7
  %v180 = vsub.s32 1, %v179
  %v181 = vrot.slane %v172, %v180
  %v182 = vlaneseq
  %v183 = vshrl.u32 %v182, 7
  %v184 = vsub.s32 2, %v183
  %v185 = vrot.slane %v172, %v184
  %v189 = vadd.f32 %v151, %v177
  %v190 = vadd.f32 %v152, %v181
  %v191 = vadd.f32 %v153, %v185
  %v192 = vadd.f32 %v154, %v177
  %v193 = vadd.f32 %v155, %v181
  %v194 = vadd.f32 %v156, %v185
  %v195 = vadd.f32 %v157, %v177
  %v196 = vadd.f32 %v158, %v181
  %v197 = vadd.f32 %v159, %v185
  %v198 = vadd.f32 %v160, %v177
  %v199 = vadd.f32 %v161, %v181
  %v200 = vadd.f32 %v162, %v185
  %v201 = vadd.f32 %v163, %v177
  %v202 = vadd.f32 %v164, %v181
  %v203 = vadd.f32 %v165, %v185
  %v204 = vadd.f32 %v166, %v177
  %v205 = vadd.f32 %v167, %v181
  %v206 = vadd.f32 %v168, %v185
  %v207 = vadd.f32 %v169, %v177
  %v208 = vadd.f32 %v170, %v181
  %v209 = vadd.f32 %v171, %v185
  %v210 = vmax.f32 %v189, 0.0
  %v211 = vmax.f32 %v190, 0.0
  %v212 = vmax.f32 %v191, 0.0
  %v213 = vmax.f32 %v192, 0.0
  %v214 = vmax.f32 %v193, 0.0
  %v215 = vmax.f32 %v194, 0.0
  %v216 = vmax.f32 %v195, 0.0
  %v217 = vmax.f32 %v196, 0.0
  %v218 = vmax.f32 %v197, 0.0
  %v219 = vmax.f32 %v198, 0.0
  %v220 = vmax.f32 %v199, 0.0
  %v221 = vmax.f32 %v200, 0.0
  %v222 = vmax.f32 %v201, 0.0
  %v223 = vmax.f32 %v202, 0.0
  %v224 = vmax.f32 %v203, 0.0
  %v225 = vmax.f32 %v204, 0.0
  %v226 = vmax.f32 %v205, 0.0
  %v227 = vmax.f32 %v206, 0.0
  %v228 = vmax.f32 %v207, 0.0
  %v229 = vmax.f32 %v208, 0.0
  %v230 = vmax.f32 %v209, 0.0
  %v231 = vpack.c.bf16 %v213, %v210
  %v232 = vpack.c.bf16 %v214, %v211
  %v233 = vpack.c.bf16 %v215, %v212
  %v234 = vpack.c.bf16 %v219, %v216
  %v235 = vpack.c.bf16 %v220, %v217
  %v236 = vpack.c.bf16 %v221, %v218
  %v237 = vpack.c.bf16 %v225, %v222
  %v238 = vpack.c.bf16 %v226, %v223
  %v239 = vpack.c.bf16 %v227, %v224
  %v240 = vpack.c.bf16 %v228, %v228
  %v241 = vpack.c.bf16 %v229, %v229
  %v242 = vpack.c.bf16 %v230, %v230
  %v243 = vld [vmem:[%s5] sm:$0xff]
  %v244 = vld [vmem:[%s5 + $0x8] sm:$0xff]
  %v245 = vld [vmem:[%s5 + $0x10] sm:$0xff]
  %v246 = vld [vmem:[%s5 + $0x18] sm:$0xff]
  %v247 = vld [vmem:[%s5 + $0x20] sm:$0xff]
  %v248 = vld [vmem:[%s5 + $0x28] sm:$0xff]
  %v249 = vld [vmem:[%s5 + $0x30] sm:$0xff]
  %v250 = vld [vmem:[%s5 + $0x38] sm:$0xff]
  %v251 = vld [vmem:[%s5 + $0x40] sm:$0xff]
  %v252 = vld [vmem:[%s5 + $0x48] sm:$0xff]
  %v253 = vld [vmem:[%s5 + $0x50] sm:$0xff]
  %v254 = vld [vmem:[%s5 + $0x58] sm:$0xff]
  %v255 = vld [vmem:[%s5 + $0x60] sm:$0xff]
  %v256 = vld [vmem:[%s5 + $0x68] sm:$0xff]
  %v257 = vld [vmem:[%s5 + $0x70] sm:$0xff]
  %v258 = vld [vmem:[%s5 + $0x78] sm:$0xff]
  %v259 = vld [vmem:[%s5 + $0x80] sm:$0xff]
  %v260 = vld [vmem:[%s5 + $0x88] sm:$0xff]
  %v261 = vld [vmem:[%s5 + $0x90] sm:$0xff]
  %v262 = vld [vmem:[%s5 + $0x98] sm:$0xff]
  %v263 = vld [vmem:[%s5 + $0xa0] sm:$0xff]
  %v264 = vld [vmem:[%s5 + $0xa8] sm:$0xff]
  %v265 = vld [vmem:[%s5 + $0xb0] sm:$0xff]
  %v266 = vld [vmem:[%s5 + $0xb8] sm:$0xff]
  %v267 = vld [vmem:[%s5 + $0xc0] sm:$0xff]
  %v268 = vld [vmem:[%s5 + $0xc8] sm:$0xff]
  %v269 = vld [vmem:[%s5 + $0xd0] sm:$0xff]
  %v270 = vld [vmem:[%s5 + $0xd8] sm:$0xff]
  %v271 = vld [vmem:[%s5 + $0xe0] sm:$0xff]
  %v272 = vld [vmem:[%s5 + $0xe8] sm:$0xff]
  %v273 = vld [vmem:[%s5 + $0xf0] sm:$0xff]
  %v274 = vld [vmem:[%s5 + $0xf8] sm:$0xff]
  %v275 = vld [vmem:[%s5 + $0x100] sm:$0xff]
  %v276 = vld [vmem:[%s5 + $0x108] sm:$0xff]
  %v277 = vld [vmem:[%s5 + $0x110] sm:$0xff]
  %v278 = vld [vmem:[%s5 + $0x118] sm:$0xff]
  %v279 = vld [vmem:[%s5 + $0x120] sm:$0xff]
  %v280 = vld [vmem:[%s5 + $0x128] sm:$0xff]
  %v281 = vld [vmem:[%s5 + $0x130] sm:$0xff]
  %v282 = vld [vmem:[%s5 + $0x138] sm:$0xff]
  %v283 = vld [vmem:[%s5 + $0x140] sm:$0xff]
  %v284 = vld [vmem:[%s5 + $0x148] sm:$0xff]
  %v285 = vld [vmem:[%s5 + $0x150] sm:$0xff]
  %v286 = vld [vmem:[%s5 + $0x158] sm:$0xff]
  %v287 = vld [vmem:[%s5 + $0x160] sm:$0xff]
  %v288 = vld [vmem:[%s5 + $0x168] sm:$0xff]
  %v289 = vld [vmem:[%s5 + $0x170] sm:$0xff]
  %v290 = vld [vmem:[%s5 + $0x178] sm:$0xff]
  %v339 = vunpack.c.l.b16 %v243
  %v340 = vunpack.c.h.b16 %v243
  %v341 = vunpack.c.l.b16 %v244
  %v342 = vunpack.c.h.b16 %v244
  %v343 = vunpack.c.l.b16 %v245
  %v344 = vunpack.c.h.b16 %v245
  %v345 = vunpack.c.l.b16 %v246
  %v346 = vunpack.c.h.b16 %v246
  %v347 = vunpack.c.l.b16 %v247
  %v348 = vunpack.c.h.b16 %v247
  %v349 = vunpack.c.l.b16 %v248
  %v350 = vunpack.c.h.b16 %v248
  %v351 = vunpack.c.l.b16 %v249
  %v352 = vunpack.c.h.b16 %v249
  %v353 = vunpack.c.l.b16 %v250
  %v354 = vunpack.c.h.b16 %v250
  %v355 = vunpack.c.l.b16 %v251
  %v356 = vunpack.c.h.b16 %v251
  %v357 = vunpack.c.l.b16 %v252
  %v358 = vunpack.c.h.b16 %v252
  %v359 = vunpack.c.l.b16 %v253
  %v360 = vunpack.c.h.b16 %v253
  %v361 = vunpack.c.l.b16 %v254
  %v362 = vunpack.c.h.b16 %v254
  %v363 = vunpack.c.l.b16 %v255
  %v364 = vunpack.c.h.b16 %v255
  %v365 = vunpack.c.l.b16 %v256
  %v366 = vunpack.c.h.b16 %v256
  %v367 = vunpack.c.l.b16 %v257
  %v368 = vunpack.c.h.b16 %v257
  %v369 = vunpack.c.l.b16 %v258
  %v370 = vunpack.c.h.b16 %v258
  %v371 = vunpack.c.l.b16 %v259
  %v372 = vunpack.c.h.b16 %v259
  %v373 = vunpack.c.l.b16 %v260
  %v374 = vunpack.c.h.b16 %v260
  %v375 = vunpack.c.l.b16 %v261
  %v376 = vunpack.c.h.b16 %v261
  %v377 = vunpack.c.l.b16 %v262
  %v378 = vunpack.c.h.b16 %v262
  %v379 = vunpack.c.l.b16 %v263
  %v380 = vunpack.c.h.b16 %v263
  %v381 = vunpack.c.l.b16 %v264
  %v382 = vunpack.c.h.b16 %v264
  %v383 = vunpack.c.l.b16 %v265
  %v384 = vunpack.c.h.b16 %v265
  %v385 = vunpack.c.l.b16 %v266
  %v386 = vunpack.c.h.b16 %v266
  %v387 = vunpack.c.l.b16 %v267
  %v388 = vunpack.c.h.b16 %v267
  %v389 = vunpack.c.l.b16 %v268
  %v390 = vunpack.c.h.b16 %v268
  %v391 = vunpack.c.l.b16 %v269
  %v392 = vunpack.c.h.b16 %v269
  %v393 = vunpack.c.l.b16 %v270
  %v394 = vunpack.c.h.b16 %v270
  %v395 = vunpack.c.l.b16 %v271
  %v396 = vunpack.c.h.b16 %v271
  %v397 = vunpack.c.l.b16 %v272
  %v398 = vunpack.c.h.b16 %v272
  %v399 = vunpack.c.l.b16 %v273
  %v400 = vunpack.c.h.b16 %v273
  %v401 = vunpack.c.l.b16 %v274
  %v402 = vunpack.c.h.b16 %v274
  %v403 = vunpack.c.l.b16 %v275
  %v404 = vunpack.c.h.b16 %v275
  %v405 = vunpack.c.l.b16 %v276
  %v406 = vunpack.c.h.b16 %v276
  %v407 = vunpack.c.l.b16 %v277
  %v408 = vunpack.c.h.b16 %v277
  %v409 = vunpack.c.l.b16 %v278
  %v410 = vunpack.c.h.b16 %v278
  %v411 = vunpack.c.l.b16 %v279
  %v412 = vunpack.c.h.b16 %v279
  %v413 = vunpack.c.l.b16 %v280
  %v414 = vunpack.c.h.b16 %v280
  %v415 = vunpack.c.l.b16 %v281
  %v416 = vunpack.c.h.b16 %v281
  %v417 = vunpack.c.l.b16 %v282
  %v418 = vunpack.c.h.b16 %v282
  %v419 = vunpack.c.l.b16 %v283
  %v420 = vunpack.c.h.b16 %v283
  %v421 = vunpack.c.l.b16 %v284
  %v422 = vunpack.c.h.b16 %v284
  %v423 = vunpack.c.l.b16 %v285
  %v424 = vunpack.c.h.b16 %v285
  %v425 = vunpack.c.l.b16 %v286
  %v426 = vunpack.c.h.b16 %v286
  %v427 = vunpack.c.l.b16 %v287
  %v428 = vunpack.c.h.b16 %v287
  %v429 = vunpack.c.l.b16 %v288
  %v430 = vunpack.c.h.b16 %v288
  %v431 = vunpack.c.l.b16 %v289
  %v432 = vunpack.c.h.b16 %v289
  %v433 = vunpack.c.l.b16 %v290
  %v434 = vunpack.c.h.b16 %v290
  %v435 = vpack.c.b16 %v341, %v339
  %v436 = vpack.c.b16 %v342, %v340
  %v437 = vpack.c.b16 %v345, %v343
  %v438 = vpack.c.b16 %v346, %v344
  %v439 = vpack.c.b16 %v349, %v347
  %v440 = vpack.c.b16 %v350, %v348
  %v441 = vpack.c.b16 %v353, %v351
  %v442 = vpack.c.b16 %v354, %v352
  %v443 = vpack.c.b16 %v357, %v355
  %v444 = vpack.c.b16 %v358, %v356
  %v445 = vpack.c.b16 %v361, %v359
  %v446 = vpack.c.b16 %v362, %v360
  %v447 = vpack.c.b16 %v365, %v363
  %v448 = vpack.c.b16 %v366, %v364
  %v449 = vpack.c.b16 %v369, %v367
  %v450 = vpack.c.b16 %v370, %v368
  %v451 = vpack.c.b16 %v373, %v371
  %v452 = vpack.c.b16 %v374, %v372
  %v453 = vpack.c.b16 %v377, %v375
  %v454 = vpack.c.b16 %v378, %v376
  %v455 = vpack.c.b16 %v381, %v379
  %v456 = vpack.c.b16 %v382, %v380
  %v457 = vpack.c.b16 %v385, %v383
  %v458 = vpack.c.b16 %v386, %v384
  %v459 = vpack.c.b16 %v389, %v387
  %v460 = vpack.c.b16 %v390, %v388
  %v461 = vpack.c.b16 %v393, %v391
  %v462 = vpack.c.b16 %v394, %v392
  %v463 = vpack.c.b16 %v397, %v395
  %v464 = vpack.c.b16 %v398, %v396
  %v465 = vpack.c.b16 %v401, %v399
  %v466 = vpack.c.b16 %v402, %v400
  %v467 = vpack.c.b16 %v405, %v403
  %v468 = vpack.c.b16 %v406, %v404
  %v469 = vpack.c.b16 %v409, %v407
  %v470 = vpack.c.b16 %v410, %v408
  %v471 = vpack.c.b16 %v413, %v411
  %v472 = vpack.c.b16 %v414, %v412
  %v473 = vpack.c.b16 %v417, %v415
  %v474 = vpack.c.b16 %v418, %v416
  %v475 = vpack.c.b16 %v421, %v419
  %v476 = vpack.c.b16 %v422, %v420
  %v477 = vpack.c.b16 %v425, %v423
  %v478 = vpack.c.b16 %v426, %v424
  %v479 = vpack.c.b16 %v429, %v427
  %v480 = vpack.c.b16 %v430, %v428
  %v481 = vpack.c.b16 %v433, %v431
  %v482 = vpack.c.b16 %v434, %v432
  %531 = vmatprep.subr.bf16.mxu0 %v450
  %532 = vmatpush1.bf16.msra.mxu0 %v449
  %533 = vmatprep.subr.bf16.mxu0 %v448
  %534 = vmatpush1.bf16.msra.mxu0 %v447
  %535 = vmatprep.subr.bf16.mxu0 %v446
  %536 = vmatpush1.bf16.msra.mxu0 %v445
  %537 = vmatprep.subr.bf16.mxu0 %v444
  %538 = vmatpush1.bf16.msra.mxu0 %v443
  %539 = vmatprep.subr.bf16.mxu0 %v442
  %540 = vmatpush1.bf16.msra.mxu0 %v441
  %541 = vmatprep.subr.bf16.mxu0 %v440
  %542 = vmatpush1.bf16.msra.mxu0 %v439
  %543 = vmatprep.subr.bf16.mxu0 %v438
  %544 = vmatpush1.bf16.msra.mxu0 %v437
  %545 = vmatprep.subr.bf16.mxu0 %v436
  %546 = vmatpush1.bf16.msra.mxu0 %v435
  %547 = vmatprep.subr.bf16.mxu0 %v466
  %548 = vmatpush2.bf16.msra.mxu0 %v465
  %549 = vmatprep.subr.bf16.mxu0 %v464
  %550 = vmatpush2.bf16.msra.mxu0 %v463
  %551 = vmatprep.subr.bf16.mxu0 %v462
  %552 = vmatpush2.bf16.msra.mxu0 %v461
  %553 = vmatprep.subr.bf16.mxu0 %v460
  %554 = vmatpush2.bf16.msra.mxu0 %v459
  %555 = vmatprep.subr.bf16.mxu0 %v458
  %556 = vmatpush2.bf16.msra.mxu0 %v457
  %557 = vmatprep.subr.bf16.mxu0 %v456
  %558 = vmatpush2.bf16.msra.mxu0 %v455
  %559 = vmatprep.subr.bf16.mxu0 %v454
  %560 = vmatpush2.bf16.msra.mxu0 %v453
  %561 = vmatprep.subr.bf16.mxu0 %v452
  %562 = vmatpush2.bf16.msra.mxu0 %v451
  %563 = vmatprep.mubr.bf16.mxu0 %v232
  %564 = vmatmul.mubr.bf16.gmra.mxu0 %v231
  %v565 = vpop.f32.mrf.mxu0
  %v566 = vadd.f32 0.0, %v565
  %v567 = vpop.f32.mrf.mxu0
  %v568 = vadd.f32 0.0, %v567
  %v569 = vpop.f32.mrf.mxu0
  %v570 = vadd.f32 0.0, %v569
  %v571 = vpop.f32.mrf.mxu0
  %v572 = vadd.f32 0.0, %v571
  %573 = vmatprep.mubr.bf16.mxu0 %v235
  %574 = vmatmul.mubr.bf16.gmra.mxu0 %v234
  %v575 = vpop.f32.mrf.mxu0
  %v576 = vadd.f32 0.0, %v575
  %v577 = vpop.f32.mrf.mxu0
  %v578 = vadd.f32 0.0, %v577
  %v579 = vpop.f32.mrf.mxu0
  %v580 = vadd.f32 0.0, %v579
  %v581 = vpop.f32.mrf.mxu0
  %v582 = vadd.f32 0.0, %v581
  %583 = vmatprep.mubr.bf16.mxu0 %v238
  %584 = vmatmul.mubr.bf16.gmra.mxu0 %v237
  %v585 = vpop.f32.mrf.mxu0
  %v586 = vadd.f32 0.0, %v585
  %v587 = vpop.f32.mrf.mxu0
  %v588 = vadd.f32 0.0, %v587
  %v589 = vpop.f32.mrf.mxu0
  %v590 = vadd.f32 0.0, %v589
  %v591 = vpop.f32.mrf.mxu0
  %v592 = vadd.f32 0.0, %v591
  %593 = vmatprep.mubr.bf16.mxu0 %v241
  %594 = vmatmul.mubr.bf16.gmra.mxu0 %v240
  %v595 = vpop.f32.mrf.mxu0
  %v596 = vadd.f32 0.0, %v595
  %v597 = vpop.f32.mrf.mxu0
  %v598 = vadd.f32 0.0, %v597
  %v599 = vpop.f32.mrf.mxu0
  %v600 = vpop.f32.mrf.mxu0
  %601 = vdwg.mxu0
  %602 = vmatprep.subr.bf16.mxu0 %v482
  %603 = vmatpush1.bf16.msra.mxu0 %v481
  %604 = vmatprep.subr.bf16.mxu0 %v480
  %605 = vmatpush1.bf16.msra.mxu0 %v479
  %606 = vmatprep.subr.bf16.mxu0 %v478
  %607 = vmatpush1.bf16.msra.mxu0 %v477
  %608 = vmatprep.subr.bf16.mxu0 %v476
  %609 = vmatpush1.bf16.msra.mxu0 %v475
  %610 = vmatprep.subr.bf16.mxu0 %v474
  %611 = vmatpush1.bf16.msra.mxu0 %v473
  %612 = vmatprep.subr.bf16.mxu0 %v472
  %613 = vmatpush1.bf16.msra.mxu0 %v471
  %614 = vmatprep.subr.bf16.mxu0 %v470
  %615 = vmatpush1.bf16.msra.mxu0 %v469
  %616 = vmatprep.subr.bf16.mxu0 %v468
  %617 = vmatpush1.bf16.msra.mxu0 %v467
  %618 = vmatprep.subr.bf16.mxu0 0
  %619 = vmatpush2.bf16.msra.mxu0 0
  %620 = vmatprep.subr.bf16.mxu0 0
  %621 = vmatpush2.bf16.msra.mxu0 0
  %622 = vmatprep.subr.bf16.mxu0 0
  %623 = vmatpush2.bf16.msra.mxu0 0
  %624 = vmatprep.subr.bf16.mxu0 0
  %625 = vmatpush2.bf16.msra.mxu0 0
  %626 = vmatprep.subr.bf16.mxu0 0
  %627 = vmatpush2.bf16.msra.mxu0 0
  %628 = vmatprep.subr.bf16.mxu0 0
  %629 = vmatpush2.bf16.msra.mxu0 0
  %630 = vmatprep.subr.bf16.mxu0 0
  %631 = vmatpush2.bf16.msra.mxu0 0
  %632 = vmatprep.subr.bf16.mxu0 0
  %633 = vmatpush2.bf16.msra.mxu0 0
  %634 = vmatprep.mubr.bf16.mxu0 0
  %635 = vmatmul.mubr.bf16.gmra.mxu0 %v233
  %v636 = vpop.f32.mrf.mxu0
  %v637 = vadd.f32 %v566, %v636
  %v638 = vpop.f32.mrf.mxu0
  %v639 = vadd.f32 %v568, %v638
  %v640 = vpop.f32.mrf.mxu0
  %v641 = vadd.f32 %v570, %v640
  %v642 = vpop.f32.mrf.mxu0
  %v643 = vadd.f32 %v572, %v642
  %644 = vmatprep.mubr.bf16.mxu0 0
  %645 = vmatmul.mubr.bf16.gmra.mxu0 %v236
  %v646 = vpop.f32.mrf.mxu0
  %v647 = vadd.f32 %v576, %v646
  %v648 = vpop.f32.mrf.mxu0
  %v649 = vadd.f32 %v578, %v648
  %v650 = vpop.f32.mrf.mxu0
  %v651 = vadd.f32 %v580, %v650
  %v652 = vpop.f32.mrf.mxu0
  %v653 = vadd.f32 %v582, %v652
  %654 = vmatprep.mubr.bf16.mxu0 0
  %655 = vmatmul.mubr.bf16.gmra.mxu0 %v239
  %v656 = vpop.f32.mrf.mxu0
  %v657 = vadd.f32 %v586, %v656
  %v658 = vpop.f32.mrf.mxu0
  %v659 = vadd.f32 %v588, %v658
  %v660 = vpop.f32.mrf.mxu0
  %v661 = vadd.f32 %v590, %v660
  %v662 = vpop.f32.mrf.mxu0
  %v663 = vadd.f32 %v592, %v662
  %664 = vmatprep.mubr.bf16.mxu0 0
  %665 = vmatmul.mubr.bf16.gmra.mxu0 %v242
  %v666 = vpop.f32.mrf.mxu0
  %v667 = vadd.f32 %v596, %v666
  %v668 = vpop.f32.mrf.mxu0
  %v669 = vadd.f32 %v598, %v668
  %v670 = vpop.f32.mrf.mxu0
  %v671 = vpop.f32.mrf.mxu0
  %672 = vdwg.mxu0
  %673 = vst [vmem:[%s6] sm:$0xff] %v637
  %674 = vst [vmem:[%s6 + $0x8] sm:$0xff] %v639
  %675 = vst [vmem:[%s6 + $0x10] sm:$0xff] %v641
  %676 = vst [vmem:[%s6 + $0x18] sm:$0xff] %v643
  %677 = vst [vmem:[%s6 + $0x20] sm:$0xff] %v647
  %678 = vst [vmem:[%s6 + $0x28] sm:$0xff] %v649
  %679 = vst [vmem:[%s6 + $0x30] sm:$0xff] %v651
  %680 = vst [vmem:[%s6 + $0x38] sm:$0xff] %v653
  %681 = vst [vmem:[%s6 + $0x40] sm:$0xff] %v657
  %682 = vst [vmem:[%s6 + $0x48] sm:$0xff] %v659
  %683 = vst [vmem:[%s6 + $0x50] sm:$0xff] %v661
  %684 = vst [vmem:[%s6 + $0x58] sm:$0xff] %v663
  %685 = vst [vmem:[%s6 + $0x60] sm:$0xff] %v667
  %686 = vst [vmem:[%s6 + $0x68] sm:$0xff] %v669
  %s687 = smul.u32 0, 56
  %v688 = vlaneseq
  %v689 = vshrl.u32 %v688, 7
  %v690 = vadd.s32 %v689, 8
  %v691 = vadd.s32 %v689, 16
  %v692 = vadd.s32 %v689, 24
  %v693 = vadd.s32 %v689, 32
  %v694 = vadd.s32 %v689, 40
  %v695 = vadd.s32 %v689, 48
  %v696 = vstv %s687
  %v697 = vadd.s32 %v696, %v689
  %v698 = vadd.s32 %v696, %v690
  %v699 = vadd.s32 %v696, %v691
  %v700 = vadd.s32 %v696, %v692
  %v701 = vadd.s32 %v696, %v693
  %v702 = vadd.s32 %v696, %v694
  %v703 = vadd.s32 %v696, %v695
  %vm704 = vcmp.lt.s32.totalorder %v697, 50
  %vm705 = vcmp.lt.s32.totalorder %v698, 50
  %vm706 = vcmp.lt.s32.totalorder %v699, 50
  %vm707 = vcmp.lt.s32.totalorder %v700, 50
  %vm708 = vcmp.lt.s32.totalorder %v701, 50
  %vm709 = vcmp.lt.s32.totalorder %v702, 50
  %vm710 = vcmp.lt.s32.totalorder %v703, 50
  %v711 = vsel %vm704, 1, 0
  %v712 = vsel %vm705, 1, 0
  %v713 = vsel %vm706, 1, 0
  %v714 = vsel %vm707, 1, 0
  %v715 = vsel %vm708, 1, 0
  %v716 = vsel %vm709, 1, 0
  %v717 = vsel %vm710, 1, 0
  %vm718 = vcmp.eq.s32.totalorder %v711, 1
  %vm719 = vcmp.eq.s32.totalorder %v712, 1
  %vm720 = vcmp.eq.s32.totalorder %v713, 1
  %vm721 = vcmp.eq.s32.totalorder %v714, 1
  %vm722 = vcmp.eq.s32.totalorder %v715, 1
  %vm723 = vcmp.eq.s32.totalorder %v716, 1
  %vm724 = vcmp.eq.s32.totalorder %v717, 1
  %v725 = vsel %vm718, %v637, 0.0
  %v726 = vsel %vm718, %v639, 0.0
  %v727 = vsel %vm719, %v641, 0.0
  %v728 = vsel %vm719, %v643, 0.0
  %v729 = vsel %vm720, %v647, 0.0
  %v730 = vsel %vm720, %v649, 0.0
  %v731 = vsel %vm721, %v651, 0.0
  %v732 = vsel %vm721, %v653, 0.0
  %v733 = vsel %vm722, %v657, 0.0
  %v734 = vsel %vm722, %v659, 0.0
  %v735 = vsel %vm723, %v661, 0.0
  %v736 = vsel %vm723, %v663, 0.0
  %v737 = vsel %vm724, %v667, 0.0
  %v738 = vsel %vm724, %v669, 0.0
  %v739 = vld [vmem:[%s7] sm:$0x3]
  %v740 = vadd.f32 %v725, %v727
  %v741 = vadd.f32 %v740, %v729
  %v742 = vadd.f32 %v741, %v731
  %v743 = vadd.f32 %v742, %v733
  %v744 = vadd.f32 %v743, %v735
  %v745 = vadd.f32 %v744, %v737
  %v746 = vrot.slane %v745, 4
  %v747 = vadd.f32 %v745, %v746
  %v748 = vrot.slane %v747, 2
  %v749 = vadd.f32 %v747, %v748
  %v750 = vrot.slane %v749, 1
  %v751 = vadd.f32 %v749, %v750
  %v752 = vadd.f32 %v726, %v728
  %v753 = vadd.f32 %v752, %v730
  %v754 = vadd.f32 %v753, %v732
  %v755 = vadd.f32 %v754, %v734
  %v756 = vadd.f32 %v755, %v736
  %v757 = vadd.f32 %v756, %v738
  %v758 = vrot.slane %v757, 4
  %v759 = vadd.f32 %v757, %v758
  %v760 = vrot.slane %v759, 2
  %v761 = vadd.f32 %v759, %v760
  %v762 = vrot.slane %v761, 1
  %v763 = vadd.f32 %v761, %v762
  %v766 = vcombine.low %v751, %v763
  %v768 = vunpack.c.l.s4 1966171168
  %v769 = vunpack.c.0.s8 %v768
  %v770 = vlaneseq
  %v771 = vshrl.u32 %v770, 7
  %v772 = vsub.s32 %v769, %v771
  %v773 = vrot.slane %v766, %v772
  %v775 = vunpack.c.l.s4 1966171168
  %v776 = vunpack.c.0.s8 %v775
  %v777 = vlaneseq
  %v778 = vshrl.u32 %v777, 7
  %v779 = vsub.s32 %v776, %v778
  %v780 = vrot.slane %v773, %v779
  %v782 = vadd.f32 %v739, %v780
  %v783 = vlaneseq
  %vm784 = vcmp.ge.s32.totalorder %v783, 0
  %vm785 = vcmp.lt.s32.totalorder %v783, 256
  %vm786 = vmand %vm784, %vm785
  %787 = vst.msk [vmem:[%s7] sm:$0x3] %vm786, %v782
  %v788 = vld [vmem:[%s8] sm:$0x3]
  %v789 = vmul.f32 %v725, %v725
  %v790 = vmul.f32 %v726, %v726
  %v791 = vmul.f32 %v727, %v727
  %v792 = vmul.f32 %v728, %v728
  %v793 = vmul.f32 %v729, %v729
  %v794 = vmul.f32 %v730, %v730
  %v795 = vmul.f32 %v731, %v731
  %v796 = vmul.f32 %v732, %v732
  %v797 = vmul.f32 %v733, %v733
  %v798 = vmul.f32 %v734, %v734
  %v799 = vmul.f32 %v735, %v735
  %v800 = vmul.f32 %v736, %v736
  %v801 = vmul.f32 %v737, %v737
  %v802 = vmul.f32 %v738, %v738
  %v803 = vadd.f32 %v789, %v791
  %v804 = vadd.f32 %v803, %v793
  %v805 = vadd.f32 %v804, %v795
  %v806 = vadd.f32 %v805, %v797
  %v807 = vadd.f32 %v806, %v799
  %v808 = vadd.f32 %v807, %v801
  %v809 = vrot.slane %v808, 4
  %v810 = vadd.f32 %v808, %v809
  %v811 = vrot.slane %v810, 2
  %v812 = vadd.f32 %v810, %v811
  %v813 = vrot.slane %v812, 1
  %v814 = vadd.f32 %v812, %v813
  %v815 = vadd.f32 %v790, %v792
  %v816 = vadd.f32 %v815, %v794
  %v817 = vadd.f32 %v816, %v796
  %v818 = vadd.f32 %v817, %v798
  %v819 = vadd.f32 %v818, %v800
  %v820 = vadd.f32 %v819, %v802
  %v821 = vrot.slane %v820, 4
  %v822 = vadd.f32 %v820, %v821
  %v823 = vrot.slane %v822, 2
  %v824 = vadd.f32 %v822, %v823
  %v825 = vrot.slane %v824, 1
  %v826 = vadd.f32 %v824, %v825
  %v829 = vcombine.low %v814, %v826
  %v831 = vunpack.c.l.s4 1966171168
  %v832 = vunpack.c.0.s8 %v831
  %v833 = vlaneseq
  %v834 = vshrl.u32 %v833, 7
  %v835 = vsub.s32 %v832, %v834
  %v836 = vrot.slane %v829, %v835
  %v838 = vunpack.c.l.s4 1966171168
  %v839 = vunpack.c.0.s8 %v838
  %v840 = vlaneseq
  %v841 = vshrl.u32 %v840, 7
  %v842 = vsub.s32 %v839, %v841
  %v843 = vrot.slane %v836, %v842
  %v845 = vadd.f32 %v788, %v843
  %846 = vst.msk [vmem:[%s8] sm:$0x3] %vm786, %v845
  // Predicated region
  $region30: #{class_block_forward.4} parent=0 // pred_check
    %p847 = pneg %p27
  $region31: #{class_block_forward.4} parent=0 // pred_check_branch
    %849 = sbr.rel (%p847) target = $region33
  $region32: #{class_block_forward.4} parent=0 // pred_region
    %v850 = vld [vmem:[%s7] sm:$0x3]
    %v851 = vmul.f32 %v850, 0.02
    %v852 = vld [vmem:[%s8] sm:$0x3]
    %v853 = vmul.f32 %v852, 0.02
    %v854 = vmul.f32 %v851, %v851
    %v855 = vsub.f32 %v853, %v854
    %856 = vst.msk [vmem:[%s7] sm:$0x3] %vm786, %v851
    %v857 = vadd.f32 %v855, 1e-05
    %v858 = vrsqrt.pop %v857
    %859 = vst.msk [vmem:[%s8] sm:$0x3] %vm786, %v858
  $region33: #{class_block_forward.4} parent=0 // pred_fallthru
    _
  // Predicated region
  $region34: #{class_block_forward.4} parent=0 // pred_check
    _
  $region35: #{class_block_forward.4} parent=0 // pred_check_branch
    %861 = sbr.rel (0) target = $region37
  $region36: #{class_block_forward.4} parent=0 // pred_region
    _
  $region37: #{class_block_forward.4} parent=0 // pred_fallthru
    _
  // Predicated region
  $region38: #{class_block_forward.4} parent=0 // pred_check
    _
  $region39: #{class_block_forward.4} parent=0 // pred_check_branch
    %863 = sbr.rel (0) target = $region41
  $region40: #{class_block_forward.4} parent=0 // pred_region
    _
  $region41: #{class_block_forward.4} parent=0 // pred_fallthru
    _
  // Predicated region
  $region42: #{class_block_forward.4} parent=0 // pred_check
    _
  $region43: #{class_block_forward.4} parent=0 // pred_check_branch
    %865 = sbr.rel (0) target = $region45
  $region44: #{class_block_forward.4} parent=0 // pred_region
    _
  $region45: #{class_block_forward.4} parent=0 // pred_fallthru
    _
  // Predicated region
  $region46: #{class_block_forward.4} parent=0 // pred_check
    _
  $region47: #{class_block_forward.4} parent=0 // pred_check_branch
    %867 = sbr.rel (0) target = $region49
  $region48: #{class_block_forward.4} parent=0 // pred_region
    _
  $region49: #{class_block_forward.4} parent=0 // pred_fallthru
    _
  // Predicated region
  $region50: #{class_block_forward.4} parent=0 // pred_check
    _
  $region51: #{class_block_forward.4} parent=0 // pred_check_branch
    %869 = sbr.rel (0) target = $region53
  $region52: #{class_block_forward.4} parent=0 // pred_region
    _
  $region53: #{class_block_forward.4} parent=0 // pred_fallthru
    _
  // Predicated region
  $region54: #{class_block_forward.4} parent=0 // pred_check
    _
  $region55: #{class_block_forward.4} parent=0 // pred_check_branch
    %871 = sbr.rel (0) target = $region57
  $region56: #{class_block_forward.4} parent=0 // pred_region
    _
  $region57: #{class_block_forward.4} parent=0 // pred_fallthru
    _

</llo_original>
